<compile_context>
chip_gen: v7x
topology: tpu7x:2x2x1
jax: 0.10.0
libtpu: 0.0.40
codegen_flags: <defaults>
</compile_context>

<pallas_src>
import numpy as np
import jax
import jax.numpy as jnp
from jax.experimental import pallas as pl
from jax.experimental.pallas import tpu as pltpu


def _round_up(x, m):
    return (x + m - 1) // m * m


# ----------------------------------------------------------------------------
# One-time weight packing (host-side numpy): PyTorch conv weight (OIHW) ->
# dense block-Toeplitz matrix over the NCHW-flattened activation vector.
# ----------------------------------------------------------------------------
def _conv_to_toeplitz(w, in_h, in_w, stride, pad):
    """w: (Cout, Cin, KH, KW) f32 -> T: (Cin*H*W, Cout*Ho*Wo) f32, plus Ho, Wo.

    Defined so that  conv2d(x, w, stride, pad)  ==
        (x.reshape(N, Cin*H*W) @ T).reshape(N, Cout, Ho, Wo)
    with PyTorch Conv2d semantics (zero padding, cross-correlation).
    """
    cout, cin, kh, kw = w.shape
    out_h = (in_h + 2 * pad - kh) // stride + 1
    out_w = (in_w + 2 * pad - kw) // stride + 1
    t = np.zeros((cin * in_h * in_w, cout * out_h * out_w), np.float32)
    ci_base = np.arange(cin) * (in_h * in_w)
    co_base = np.arange(cout) * (out_h * out_w)
    for oy in range(out_h):
        for ox in range(out_w):
            cols = co_base + oy * out_w + ox
            for ky in range(kh):
                iy = oy * stride + ky - pad
                if not 0 <= iy < in_h:
                    continue
                for kx in range(kw):
                    ix = ox * stride + kx - pad
                    if not 0 <= ix < in_w:
                        continue
                    rows = ci_base + iy * in_w + ix
                    t[np.ix_(rows, cols)] = w[:, :, ky, kx].T
    return t, out_h, out_w


def pack_discriminator(params, image_size, c_dim, repeat_num):
    """Pre-pack all conv weights (once) into 128-padded bf16 Toeplitz matrices."""
    h = w = image_size
    k_real = 3 * h * w
    k_pad = _round_up(k_real, 128)
    meta = {"repeat_num": repeat_num, "k0_real": k_real, "k0_pad": k_pad}

    ts, bs, shapes, n_pads = [], [], [], []
    for i in range(repeat_num):
        wt = np.asarray(params[f"main_{i}_w"], np.float32)
        bt = np.asarray(params[f"main_{i}_b"], np.float32)
        cout = wt.shape[0]
        t, oh, ow = _conv_to_toeplitz(wt, h, w, stride=2, pad=1)
        assert t.shape[0] == k_real
        n_real = cout * oh * ow
        n_pad = _round_up(n_real, 128)
        t_p = np.zeros((k_pad, n_pad), np.float32)
        t_p[:k_real, :n_real] = t
        b_p = np.zeros((1, n_pad), np.float32)
        b_p[0, :n_real] = np.repeat(bt, oh * ow)
        ts.append(jnp.asarray(t_p, jnp.bfloat16))
        bs.append(jnp.asarray(b_p, jnp.float32))
        shapes.append((cout, oh, ow))
        n_pads.append(n_pad)
        h, w, k_real, k_pad = oh, ow, n_real, n_pad

    # Heads: conv1 (3x3, stride 1, pad 1, no bias) and conv2 (k x k, no pad,
    # no bias) share one matrix (output columns concatenated).  On a 1x1 final
    # map only conv1's centre tap lands in-bounds -> K=C matmul for free.
    w_head1 = np.asarray(params["conv1_w"], np.float32)
    w_head2 = np.asarray(params["conv2_w"], np.float32)
    t1, hh1, ww1 = _conv_to_toeplitz(w_head1, h, w, stride=1, pad=1)
    t2, hh2, ww2 = _conv_to_toeplitz(w_head2, h, w, stride=1, pad=0)
    assert t1.shape[0] == k_real and t2.shape[0] == k_real
    n1 = 1 * hh1 * ww1
    n2 = c_dim * hh2 * ww2
    n_head_pad = _round_up(n1 + n2, 128)
    th = np.zeros((k_pad, n_head_pad), np.float32)
    th[:k_real, :n1] = t1
    th[:k_real, n1:n1 + n2] = t2

    meta.update(
        layer_shapes=tuple(shapes),
        layer_n_pad=tuple(n_pads),
        head_shapes=((1, hh1, ww1), (c_dim, hh2, ww2)),
        head_n=(n1, n2, n_head_pad),
    )
    packed = {"Ts": tuple(ts), "bs": tuple(bs), "Th": jnp.asarray(th, jnp.bfloat16)}
    return packed, meta


# ----------------------------------------------------------------------------
# The fused Pallas kernel: whole network in one invocation, VMEM-resident.
# ----------------------------------------------------------------------------
def _make_fused_kernel(n_layers):
    """refs = [x, T_0..T_{n-1}, b_0..b_{n-1}, T_head, feat_0..feat_{n-1}, heads]."""

    def kernel(*refs):
        x_ref = refs[0]
        t_refs = refs[1:1 + n_layers]
        b_refs = refs[1 + n_layers:1 + 2 * n_layers]
        th_ref = refs[1 + 2 * n_layers]
        feat_refs = refs[2 + 2 * n_layers:2 + 3 * n_layers]
        head_ref = refs[2 + 3 * n_layers]

        h = x_ref[...]                                       # (Mp, K0p) bf16
        for i in range(n_layers):
            # Single-K-block MXU matmul (no reduction grid, no acc scratch).
            a = jnp.dot(h, t_refs[i][...],
                        preferred_element_type=jnp.float32)
            a = a + b_refs[i][...]                           # (1, Np) bias bcast
            a = jnp.where(a >= 0.0, a, 0.01 * a)             # LeakyReLU(0.01)
            feat_refs[i][...] = a                            # f32 feature out
            h = a.astype(jnp.bfloat16)                       # bf16 for next MXU
        # Fused conv1/conv2 heads (no bias, no activation).
        head_ref[...] = jnp.dot(h, th_ref[...],
                                preferred_element_type=jnp.float32)

    return kernel


def make_discriminator_forward(packed, meta):
    n_layers = meta["repeat_num"]
    k0_real, k0_pad = meta["k0_real"], meta["k0_pad"]
    layer_shapes = meta["layer_shapes"]
    layer_n_pad = meta["layer_n_pad"]
    (c1, h1, w1), (c2, h2, w2) = meta["head_shapes"]
    n1, n2, n_head_pad = meta["head_n"]

    kernel = _make_fused_kernel(n_layers)
    ts, bs, th = packed["Ts"], packed["bs"], packed["Th"]

    @jax.jit
    def forward(x):
        batch = x.shape[0]
        mp = _round_up(batch, 16)                 # bf16 sublane-friendly rows
        x_flat = x.reshape(batch, -1).astype(jnp.bfloat16)   # NCHW-flat order
        x_p = jnp.pad(x_flat, ((0, mp - batch), (0, k0_pad - k0_real)))

        out_shape = tuple(
            jax.ShapeDtypeStruct((mp, n), jnp.float32) for n in layer_n_pad
        ) + (jax.ShapeDtypeStruct((mp, n_head_pad), jnp.float32),)

        # Single fused kernel invocation.  No grid: every operand is a full
        # array resident in VMEM (~1.2 MB total, fits v5e/v6e/v7x easily).
        # TODO(synk): for batch >> 16, add a leading "parallel" batch grid
        # axis so v7x's two TensorCores both get work.
        outs = pl.pallas_call(
            kernel,
            out_shape=out_shape,
            compiler_params=pltpu.CompilerParams(
                vmem_limit_bytes=32 * 1024 * 1024),
        )(x_p, *ts, *bs, th)

        out_feats = []
        for i in range(n_layers):
            c, oh, ow = layer_shapes[i]
            f = outs[i][:batch, :c * oh * ow].reshape(batch, c, oh, ow)
            if i < 4:  # the PyTorch module hardcodes `if i < 4`
                out_feats.append(jnp.squeeze(f))

        heads = outs[n_layers][:batch]
        out_real = jnp.squeeze(heads[:, :n1].reshape(batch, c1, h1, w1))
        out_aux = jnp.squeeze(heads[:, n1:n1 + n2].reshape(batch, c2, h2, w2))
        return out_real, out_aux, out_feats

    return forward


# ----------------------------------------------------------------------------
# Parameter init (torch layout) and a pure-XLA f32 reference for validation.
# ----------------------------------------------------------------------------
def init_discriminator_params(key, image_size=16, conv_dim=8, c_dim=5, repeat_num=4):
    params = {}
    keys = jax.random.split(key, 2 * repeat_num + 2)
    in_c = 3
    curr_dim = conv_dim
    for i in range(repeat_num):
        out_c = conv_dim if i == 0 else curr_dim * 2
        if i > 0:
            curr_dim = curr_dim * 2
        params[f"main_{i}_w"] = 0.05 * jax.random.normal(
            keys[2 * i], (out_c, in_c, 4, 4), jnp.float32)
        params[f"main_{i}_b"] = 0.05 * jax.random.normal(
            keys[2 * i + 1], (out_c,), jnp.float32)
        in_c = out_c
    k_size = image_size // (2 ** repeat_num)
    params["conv1_w"] = 0.05 * jax.random.normal(
        keys[2 * repeat_num], (1, curr_dim, 3, 3), jnp.float32)
    params["conv2_w"] = 0.05 * jax.random.normal(
        keys[2 * repeat_num + 1], (c_dim, curr_dim, k_size, k_size), jnp.float32)
    return params


def _reference_forward(x, params, repeat_num):
    """Pure-XLA reference matching the PyTorch module's forward."""
    def conv(h, w, b, stride, pad):
        out = jax.lax.conv_general_dilated(
            h, w, (stride, stride), [(pad, pad), (pad, pad)],
            dimension_numbers=("NCHW", "OIHW", "NCHW"))
        return out if b is None else out + b[None, :, None, None]

    h = x
    feats = []
    for i in range(repeat_num):
        h = conv(h, params[f"main_{i}_w"], params[f"main_{i}_b"], 2, 1)
        h = jnp.where(h >= 0, h, 0.01 * h)
        if i < 4:
            feats.append(jnp.squeeze(h))
    out_real = conv(h, params["conv1_w"], None, 1, 1)
    out_aux = conv(h, params["conv2_w"], None, 1, 0)
    return jnp.squeeze(out_real), jnp.squeeze(out_aux), feats


# ----------------------------------------------------------------------------
if __name__ == "__main__":
    # Small config consistent with the module: image_size=16, conv_dim=8,
    # c_dim=5, repeat_num=4 -> final feature map 1x1, k_size = 1.
    IMAGE_SIZE, CONV_DIM, C_DIM, REPEAT_NUM, BATCH = 16, 8, 5, 4, 2

    key = jax.random.PRNGKey(0)
    k_x, k_p = jax.random.split(key)
    x = jax.random.normal(k_x, (BATCH, 3, IMAGE_SIZE, IMAGE_SIZE), jnp.float32)
    params = init_discriminator_params(
        k_p, image_size=IMAGE_SIZE, conv_dim=CONV_DIM, c_dim=C_DIM,
        repeat_num=REPEAT_NUM)

    packed, meta = pack_discriminator(params, IMAGE_SIZE, C_DIM, REPEAT_NUM)
    forward = make_discriminator_forward(packed, meta)

    out_real, out_aux, out_feats = forward(x)
    jax.block_until_ready(out_real)
    jax.block_until_ready(out_aux)
    for f in out_feats:
        jax.block_until_ready(f)

    # Shape sanity (mirrors torch .squeeze() behaviour for this config).
    assert out_real.shape == (BATCH,)
    assert out_aux.shape == (BATCH, C_DIM)
    assert out_feats[0].shape == (BATCH, CONV_DIM, 8, 8)
    assert out_feats[3].shape == (BATCH, CONV_DIM * 8)

    # Numerical check against the pure-XLA f32 reference (kernel uses bf16 MXU
    # operands -> loose tolerance).
    ref_real, ref_aux, ref_feats = _reference_forward(x, params, REPEAT_NUM)
    np.testing.assert_allclose(np.asarray(out_real), np.asarray(ref_real),
                               rtol=0.1, atol=1e-2)
    np.testing.assert_allclose(np.asarray(out_aux), np.asarray(ref_aux),
                               rtol=0.1, atol=1e-2)
    for got, ref in zip(out_feats, ref_feats):
        np.testing.assert_allclose(np.asarray(got), np.asarray(ref),
                                   rtol=0.1, atol=1e-2)

    print("KERNEL_OK")
</pallas_src>

<mosaic_0001>
module attributes {stable_mosaic.version = 11 : i64} {
  func.func @kernel(%arg0: memref<16x768xbf16, #tpu.memory_space<vmem>>, %arg1: memref<768x512xbf16, #tpu.memory_space<vmem>>, %arg2: memref<512x256xbf16, #tpu.memory_space<vmem>>, %arg3: memref<256x128xbf16, #tpu.memory_space<vmem>>, %arg4: memref<128x128xbf16, #tpu.memory_space<vmem>>, %arg5: memref<1x512xf32, #tpu.memory_space<vmem>>, %arg6: memref<1x256xf32, #tpu.memory_space<vmem>>, %arg7: memref<1x128xf32, #tpu.memory_space<vmem>>, %arg8: memref<1x128xf32, #tpu.memory_space<vmem>>, %arg9: memref<128x128xbf16, #tpu.memory_space<vmem>>, %arg10: memref<16x512xf32, #tpu.memory_space<vmem>>, %arg11: memref<16x256xf32, #tpu.memory_space<vmem>>, %arg12: memref<16x128xf32, #tpu.memory_space<vmem>>, %arg13: memref<16x128xf32, #tpu.memory_space<vmem>>, %arg14: memref<16x128xf32, #tpu.memory_space<vmem>>) attributes {dimension_semantics = [], scalar_prefetch = 0 : i64, scratch_operands = 0 : i64, tpu.core_type = #tpu.core_type<tc>} {
    %c0 = arith.constant 0 : index
    %c0_0 = arith.constant 0 : index
    %0 = vector.load %arg0[%c0, %c0_0] : memref<16x768xbf16, #tpu.memory_space<vmem>>, vector<16x768xbf16>
    %c0_1 = arith.constant 0 : index
    %c0_2 = arith.constant 0 : index
    %1 = vector.load %arg1[%c0_1, %c0_2] : memref<768x512xbf16, #tpu.memory_space<vmem>>, vector<768x512xbf16>
    %cst = arith.constant dense<0.000000e+00> : vector<16x512xf32>
    %2 = tpu.matmul %0, %1, %cst {dimension_numbers = #tpu.dot_dimension_numbers<[1], [0], [0], [1], [0, 0, 1, 1], [], []>} : vector<16x768xbf16>, vector<768x512xbf16>, vector<16x512xf32> -> vector<16x512xf32>
    %c0_3 = arith.constant 0 : index
    %c0_4 = arith.constant 0 : index
    %3 = vector.load %arg5[%c0_3, %c0_4] : memref<1x512xf32, #tpu.memory_space<vmem>>, vector<1x512xf32>
    %4 = vector.broadcast %3 : vector<1x512xf32> to vector<16x512xf32>
    %5 = arith.addf %2, %4 : vector<16x512xf32>
    %cst_5 = arith.constant 0.000000e+00 : f32
    %6 = vector.broadcast %cst_5 : f32 to vector<16x512xf32>
    %7 = arith.cmpf oge, %5, %6 : vector<16x512xf32>
    %cst_6 = arith.constant 0.00999999977 : f32
    %8 = vector.broadcast %cst_6 : f32 to vector<16x512xf32>
    %9 = arith.mulf %8, %5 : vector<16x512xf32>
    %10 = arith.select %7, %5, %9 : vector<16x512xi1>, vector<16x512xf32>
    %c0_7 = arith.constant 0 : index
    %c0_8 = arith.constant 0 : index
    %11 = vector.load %arg10[%c0_7, %c0_8] : memref<16x512xf32, #tpu.memory_space<vmem>>, vector<16x512xf32>
    tpu.vector_store %arg10[%c0_7, %c0_8], %10 {strides = array<i32>} : memref<16x512xf32, #tpu.memory_space<vmem>>, vector<16x512xf32>,
    %12 = arith.truncf %10 : vector<16x512xf32> to vector<16x512xbf16>
    %c0_9 = arith.constant 0 : index
    %c0_10 = arith.constant 0 : index
    %13 = vector.load %arg2[%c0_9, %c0_10] : memref<512x256xbf16, #tpu.memory_space<vmem>>, vector<512x256xbf16>
    %cst_11 = arith.constant dense<0.000000e+00> : vector<16x256xf32>
    %14 = tpu.matmul %12, %13, %cst_11 {dimension_numbers = #tpu.dot_dimension_numbers<[1], [0], [0], [1], [0, 0, 1, 1], [], []>} : vector<16x512xbf16>, vector<512x256xbf16>, vector<16x256xf32> -> vector<16x256xf32>
    %c0_12 = arith.constant 0 : index
    %c0_13 = arith.constant 0 : index
    %15 = vector.load %arg6[%c0_12, %c0_13] : memref<1x256xf32, #tpu.memory_space<vmem>>, vector<1x256xf32>
    %16 = vector.broadcast %15 : vector<1x256xf32> to vector<16x256xf32>
    %17 = arith.addf %14, %16 : vector<16x256xf32>
    %cst_14 = arith.constant 0.000000e+00 : f32
    %18 = vector.broadcast %cst_14 : f32 to vector<16x256xf32>
    %19 = arith.cmpf oge, %17, %18 : vector<16x256xf32>
    %cst_15 = arith.constant 0.00999999977 : f32
    %20 = vector.broadcast %cst_15 : f32 to vector<16x256xf32>
    %21 = arith.mulf %20, %17 : vector<16x256xf32>
    %22 = arith.select %19, %17, %21 : vector<16x256xi1>, vector<16x256xf32>
    %c0_16 = arith.constant 0 : index
    %c0_17 = arith.constant 0 : index
    %23 = vector.load %arg11[%c0_16, %c0_17] : memref<16x256xf32, #tpu.memory_space<vmem>>, vector<16x256xf32>
    tpu.vector_store %arg11[%c0_16, %c0_17], %22 {strides = array<i32>} : memref<16x256xf32, #tpu.memory_space<vmem>>, vector<16x256xf32>,
    %24 = arith.truncf %22 : vector<16x256xf32> to vector<16x256xbf16>
    %c0_18 = arith.constant 0 : index
    %c0_19 = arith.constant 0 : index
    %25 = vector.load %arg3[%c0_18, %c0_19] : memref<256x128xbf16, #tpu.memory_space<vmem>>, vector<256x128xbf16>
    %cst_20 = arith.constant dense<0.000000e+00> : vector<16x128xf32>
    %26 = tpu.matmul %24, %25, %cst_20 {dimension_numbers = #tpu.dot_dimension_numbers<[1], [0], [0], [1], [0, 0, 1, 1], [], []>} : vector<16x256xbf16>, vector<256x128xbf16>, vector<16x128xf32> -> vector<16x128xf32>
    %c0_21 = arith.constant 0 : index
    %c0_22 = arith.constant 0 : index
    %27 = vector.load %arg7[%c0_21, %c0_22] : memref<1x128xf32, #tpu.memory_space<vmem>>, vector<1x128xf32>
    %28 = vector.broadcast %27 : vector<1x128xf32> to vector<16x128xf32>
    %29 = arith.addf %26, %28 : vector<16x128xf32>
    %cst_23 = arith.constant 0.000000e+00 : f32
    %30 = vector.broadcast %cst_23 : f32 to vector<16x128xf32>
    %31 = arith.cmpf oge, %29, %30 : vector<16x128xf32>
    %cst_24 = arith.constant 0.00999999977 : f32
    %32 = vector.broadcast %cst_24 : f32 to vector<16x128xf32>
    %33 = arith.mulf %32, %29 : vector<16x128xf32>
    %34 = arith.select %31, %29, %33 : vector<16x128xi1>, vector<16x128xf32>
    %c0_25 = arith.constant 0 : index
    %c0_26 = arith.constant 0 : index
    %35 = vector.load %arg12[%c0_25, %c0_26] : memref<16x128xf32, #tpu.memory_space<vmem>>, vector<16x128xf32>
    tpu.vector_store %arg12[%c0_25, %c0_26], %34 {strides = array<i32>} : memref<16x128xf32, #tpu.memory_space<vmem>>, vector<16x128xf32>,
    %36 = arith.truncf %34 : vector<16x128xf32> to vector<16x128xbf16>
    %c0_27 = arith.constant 0 : index
    %c0_28 = arith.constant 0 : index
    %37 = vector.load %arg4[%c0_27, %c0_28] : memref<128x128xbf16, #tpu.memory_space<vmem>>, vector<128x128xbf16>
    %cst_29 = arith.constant dense<0.000000e+00> : vector<16x128xf32>
    %38 = tpu.matmul %36, %37, %cst_29 {dimension_numbers = #tpu.dot_dimension_numbers<[1], [0], [0], [1], [0, 0, 1, 1], [], []>} : vector<16x128xbf16>, vector<128x128xbf16>, vector<16x128xf32> -> vector<16x128xf32>
    %c0_30 = arith.constant 0 : index
    %c0_31 = arith.constant 0 : index
    %39 = vector.load %arg8[%c0_30, %c0_31] : memref<1x128xf32, #tpu.memory_space<vmem>>, vector<1x128xf32>
    %40 = vector.broadcast %39 : vector<1x128xf32> to vector<16x128xf32>
    %41 = arith.addf %38, %40 : vector<16x128xf32>
    %cst_32 = arith.constant 0.000000e+00 : f32
    %42 = vector.broadcast %cst_32 : f32 to vector<16x128xf32>
    %43 = arith.cmpf oge, %41, %42 : vector<16x128xf32>
    %cst_33 = arith.constant 0.00999999977 : f32
    %44 = vector.broadcast %cst_33 : f32 to vector<16x128xf32>
    %45 = arith.mulf %44, %41 : vector<16x128xf32>
    %46 = arith.select %43, %41, %45 : vector<16x128xi1>, vector<16x128xf32>
    %c0_34 = arith.constant 0 : index
    %c0_35 = arith.constant 0 : index
    %47 = vector.load %arg13[%c0_34, %c0_35] : memref<16x128xf32, #tpu.memory_space<vmem>>, vector<16x128xf32>
    tpu.vector_store %arg13[%c0_34, %c0_35], %46 {strides = array<i32>} : memref<16x128xf32, #tpu.memory_space<vmem>>, vector<16x128xf32>,
    %48 = arith.truncf %46 : vector<16x128xf32> to vector<16x128xbf16>
    %c0_36 = arith.constant 0 : index
    %c0_37 = arith.constant 0 : index
    %49 = vector.load %arg9[%c0_36, %c0_37] : memref<128x128xbf16, #tpu.memory_space<vmem>>, vector<128x128xbf16>
    %cst_38 = arith.constant dense<0.000000e+00> : vector<16x128xf32>
    %50 = tpu.matmul %48, %49, %cst_38 {dimension_numbers = #tpu.dot_dimension_numbers<[1], [0], [0], [1], [0, 0, 1, 1], [], []>} : vector<16x128xbf16>, vector<128x128xbf16>, vector<16x128xf32> -> vector<16x128xf32>
    %c0_39 = arith.constant 0 : index
    %c0_40 = arith.constant 0 : index
    %51 = vector.load %arg14[%c0_39, %c0_40] : memref<16x128xf32, #tpu.memory_space<vmem>>, vector<16x128xf32>
    tpu.vector_store %arg14[%c0_39, %c0_40], %50 {strides = array<i32>} : memref<16x128xf32, #tpu.memory_space<vmem>>, vector<16x128xf32>,
    return
  }
}

</mosaic_0001>

<llo_original>
// kernel: forward.1
$region0: #{forward.1}
  #allocation0 [shape = 'u32[]', space=smem, size = 0x4, offset = 0x4, fixed_abs, tag = 'smem constant byte address 0x4 - core index']
  #allocation1 [shape = 'u32[144,128]{1,0:T(1,128)}', space=vmem, size = 0x12000, scoped, tag = 'internal scratch']
  %s0 = inlined_call_operand.vmem [shape: bf16[16,768], index: 0, kind: input, shape index: {}]
  %s1 = inlined_call_operand.vmem [shape: bf16[768,512], index: 1, kind: input, shape index: {}]
  %s2 = inlined_call_operand.vmem [shape: bf16[512,256], index: 2, kind: input, shape index: {}]
  %s3 = inlined_call_operand.vmem [shape: bf16[256,128], index: 3, kind: input, shape index: {}]
  %s4 = inlined_call_operand.vmem [shape: bf16[128,128], index: 4, kind: input, shape index: {}]
  %s5 = inlined_call_operand.vmem [shape: f32[1,512], index: 5, kind: input, shape index: {}]
  %s6 = inlined_call_operand.vmem [shape: f32[1,256], index: 6, kind: input, shape index: {}]
  %s7 = inlined_call_operand.vmem [shape: f32[1,128], index: 7, kind: input, shape index: {}]
  %s8 = inlined_call_operand.vmem [shape: f32[1,128], index: 8, kind: input, shape index: {}]
  %s9 = inlined_call_operand.vmem [shape: bf16[128,128], index: 9, kind: input, shape index: {}]
  %s10 = inlined_call_operand.vmem [shape: f32[16,512], index: 10, kind: output, shape index: {0}]
  %s11 = inlined_call_operand.vmem [shape: f32[16,256], index: 11, kind: output, shape index: {1}]
  %s12 = inlined_call_operand.vmem [shape: f32[16,128], index: 12, kind: output, shape index: {2}]
  %s13 = inlined_call_operand.vmem [shape: f32[16,128], index: 13, kind: output, shape index: {3}]
  %s14 = inlined_call_operand.vmem [shape: f32[16,128], index: 14, kind: output, shape index: {4}]
  %15 = xla_tuple %s10, %s11, %s12, %s13, %s14
  %s16 = sld [smem:[#allocation0]]
  $region82: #{forward.1} parent=0
    _
  %s18 = ssub.s32 1, %s16
  %s19 = scalar_select 0, %s18, %s16
  // Predicated region
  $region2: #{forward.1} parent=0 // pred_check
    _
  $region3: #{forward.1} parent=0 // pred_check_branch
    %21 = sbr.rel (0) target = $region5
  $region4: #{forward.1} parent=0 // pred_region
    _
  $region5: #{forward.1} parent=0 // pred_fallthru
    _
  // Predicated region
  $region6: #{forward.1} parent=0 // pred_check
    _
  $region7: #{forward.1} parent=0 // pred_check_branch
    %23 = sbr.rel (0) target = $region9
  $region8: #{forward.1} parent=0 // pred_region
    _
  $region9: #{forward.1} parent=0 // pred_fallthru
    _
  // Predicated region
  $region10: #{forward.1} parent=0 // pred_check
    _
  $region11: #{forward.1} parent=0 // pred_check_branch
    %25 = sbr.rel (0) target = $region13
  $region12: #{forward.1} parent=0 // pred_region
    _
  $region13: #{forward.1} parent=0 // pred_fallthru
    _
  // Predicated region
  $region14: #{forward.1} parent=0 // pred_check
    _
  $region15: #{forward.1} parent=0 // pred_check_branch
    %27 = sbr.rel (0) target = $region17
  $region16: #{forward.1} parent=0 // pred_region
    _
  $region17: #{forward.1} parent=0 // pred_fallthru
    _
  // Predicated region
  $region18: #{forward.1} parent=0 // pred_check
    _
  $region19: #{forward.1} parent=0 // pred_check_branch
    %29 = sbr.rel (0) target = $region21
  $region20: #{forward.1} parent=0 // pred_region
    _
  $region21: #{forward.1} parent=0 // pred_fallthru
    _
  // Predicated region
  $region22: #{forward.1} parent=0 // pred_check
    _
  $region23: #{forward.1} parent=0 // pred_check_branch
    %31 = sbr.rel (0) target = $region25
  $region24: #{forward.1} parent=0 // pred_region
    _
  $region25: #{forward.1} parent=0 // pred_fallthru
    _
  // Predicated region
  $region26: #{forward.1} parent=0 // pred_check
    _
  $region27: #{forward.1} parent=0 // pred_check_branch
    %33 = sbr.rel (0) target = $region29
  $region28: #{forward.1} parent=0 // pred_region
    _
  $region29: #{forward.1} parent=0 // pred_fallthru
    _
  // Predicated region
  $region30: #{forward.1} parent=0 // pred_check
    _
  $region31: #{forward.1} parent=0 // pred_check_branch
    %35 = sbr.rel (0) target = $region33
  $region32: #{forward.1} parent=0 // pred_region
    _
  $region33: #{forward.1} parent=0 // pred_fallthru
    _
  // Predicated region
  $region34: #{forward.1} parent=0 // pred_check
    _
  $region35: #{forward.1} parent=0 // pred_check_branch
    %37 = sbr.rel (0) target = $region37
  $region36: #{forward.1} parent=0 // pred_region
    _
  $region37: #{forward.1} parent=0 // pred_fallthru
    _
  // Predicated region
  $region38: #{forward.1} parent=0 // pred_check
    _
  $region39: #{forward.1} parent=0 // pred_check_branch
    %39 = sbr.rel (0) target = $region41
  $region40: #{forward.1} parent=0 // pred_region
    _
  $region41: #{forward.1} parent=0 // pred_fallthru
    _
  %v41 = vld [vmem:[%s0] sm:$0xff]
  %v42 = vld [vmem:[%s0 + $0x8] sm:$0xff]
  %v43 = vld [vmem:[%s0 + $0x10] sm:$0xff]
  %v44 = vld [vmem:[%s0 + $0x18] sm:$0xff]
  %v45 = vld [vmem:[%s0 + $0x20] sm:$0xff]
  %v46 = vld [vmem:[%s0 + $0x28] sm:$0xff]
  %v47 = vld [vmem:[%s1] sm:$0xff]
  %v48 = vld [vmem:[%s1 + $0x8] sm:$0xff]
  %v49 = vld [vmem:[%s1 + $0x10] sm:$0xff]
  %v50 = vld [vmem:[%s1 + $0x18] sm:$0xff]
  %v51 = vld [vmem:[%s1 + $0x20] sm:$0xff]
  %v52 = vld [vmem:[%s1 + $0x28] sm:$0xff]
  %v53 = vld [vmem:[%s1 + $0x30] sm:$0xff]
  %v54 = vld [vmem:[%s1 + $0x38] sm:$0xff]
  %v55 = vld [vmem:[%s1 + $0x40] sm:$0xff]
  %v56 = vld [vmem:[%s1 + $0x48] sm:$0xff]
  %v57 = vld [vmem:[%s1 + $0x50] sm:$0xff]
  %v58 = vld [vmem:[%s1 + $0x58] sm:$0xff]
  %v59 = vld [vmem:[%s1 + $0x60] sm:$0xff]
  %v60 = vld [vmem:[%s1 + $0x68] sm:$0xff]
  %v61 = vld [vmem:[%s1 + $0x70] sm:$0xff]
  %v62 = vld [vmem:[%s1 + $0x78] sm:$0xff]
  %v63 = vld [vmem:[%s1 + $0x80] sm:$0xff]
  %v64 = vld [vmem:[%s1 + $0x88] sm:$0xff]
  %v65 = vld [vmem:[%s1 + $0x90] sm:$0xff]
  %v66 = vld [vmem:[%s1 + $0x98] sm:$0xff]
  %v67 = vld [vmem:[%s1 + $0xa0] sm:$0xff]
  %v68 = vld [vmem:[%s1 + $0xa8] sm:$0xff]
  %v69 = vld [vmem:[%s1 + $0xb0] sm:$0xff]
  %v70 = vld [vmem:[%s1 + $0xb8] sm:$0xff]
  %v71 = vld [vmem:[%s1 + $0xc0] sm:$0xff]
  %v72 = vld [vmem:[%s1 + $0xc8] sm:$0xff]
  %v73 = vld [vmem:[%s1 + $0xd0] sm:$0xff]
  %v74 = vld [vmem:[%s1 + $0xd8] sm:$0xff]
  %v75 = vld [vmem:[%s1 + $0xe0] sm:$0xff]
  %v76 = vld [vmem:[%s1 + $0xe8] sm:$0xff]
  %v77 = vld [vmem:[%s1 + $0xf0] sm:$0xff]
  %v78 = vld [vmem:[%s1 + $0xf8] sm:$0xff]
  %v79 = vld [vmem:[%s1 + $0x100] sm:$0xff]
  %v80 = vld [vmem:[%s1 + $0x108] sm:$0xff]
  %v81 = vld [vmem:[%s1 + $0x110] sm:$0xff]
  %v82 = vld [vmem:[%s1 + $0x118] sm:$0xff]
  %v83 = vld [vmem:[%s1 + $0x120] sm:$0xff]
  %v84 = vld [vmem:[%s1 + $0x128] sm:$0xff]
  %v85 = vld [vmem:[%s1 + $0x130] sm:$0xff]
  %v86 = vld [vmem:[%s1 + $0x138] sm:$0xff]
  %v87 = vld [vmem:[%s1 + $0x140] sm:$0xff]
  %v88 = vld [vmem:[%s1 + $0x148] sm:$0xff]
  %v89 = vld [vmem:[%s1 + $0x150] sm:$0xff]
  %v90 = vld [vmem:[%s1 + $0x158] sm:$0xff]
  %v91 = vld [vmem:[%s1 + $0x160] sm:$0xff]
  %v92 = vld [vmem:[%s1 + $0x168] sm:$0xff]
  %v93 = vld [vmem:[%s1 + $0x170] sm:$0xff]
  %v94 = vld [vmem:[%s1 + $0x178] sm:$0xff]
  %v95 = vld [vmem:[%s1 + $0x180] sm:$0xff]
  %v96 = vld [vmem:[%s1 + $0x188] sm:$0xff]
  %v97 = vld [vmem:[%s1 + $0x190] sm:$0xff]
  %v98 = vld [vmem:[%s1 + $0x198] sm:$0xff]
  %v99 = vld [vmem:[%s1 + $0x1a0] sm:$0xff]
  %v100 = vld [vmem:[%s1 + $0x1a8] sm:$0xff]
  %v101 = vld [vmem:[%s1 + $0x1b0] sm:$0xff]
  %v102 = vld [vmem:[%s1 + $0x1b8] sm:$0xff]
  %v103 = vld [vmem:[%s1 + $0x1c0] sm:$0xff]
  %v104 = vld [vmem:[%s1 + $0x1c8] sm:$0xff]
  %v105 = vld [vmem:[%s1 + $0x1d0] sm:$0xff]
  %v106 = vld [vmem:[%s1 + $0x1d8] sm:$0xff]
  %v107 = vld [vmem:[%s1 + $0x1e0] sm:$0xff]
  %v108 = vld [vmem:[%s1 + $0x1e8] sm:$0xff]
  %v109 = vld [vmem:[%s1 + $0x1f0] sm:$0xff]
  %v110 = vld [vmem:[%s1 + $0x1f8] sm:$0xff]
  %v111 = vld [vmem:[%s1 + $0x200] sm:$0xff]
  %v112 = vld [vmem:[%s1 + $0x208] sm:$0xff]
  %v113 = vld [vmem:[%s1 + $0x210] sm:$0xff]
  %v114 = vld [vmem:[%s1 + $0x218] sm:$0xff]
  %v115 = vld [vmem:[%s1 + $0x220] sm:$0xff]
  %v116 = vld [vmem:[%s1 + $0x228] sm:$0xff]
  %v117 = vld [vmem:[%s1 + $0x230] sm:$0xff]
  %v118 = vld [vmem:[%s1 + $0x238] sm:$0xff]
  %v119 = vld [vmem:[%s1 + $0x240] sm:$0xff]
  %v120 = vld [vmem:[%s1 + $0x248] sm:$0xff]
  %v121 = vld [vmem:[%s1 + $0x250] sm:$0xff]
  %v122 = vld [vmem:[%s1 + $0x258] sm:$0xff]
  %v123 = vld [vmem:[%s1 + $0x260] sm:$0xff]
  %v124 = vld [vmem:[%s1 + $0x268] sm:$0xff]
  %v125 = vld [vmem:[%s1 + $0x270] sm:$0xff]
  %v126 = vld [vmem:[%s1 + $0x278] sm:$0xff]
  %v127 = vld [vmem:[%s1 + $0x280] sm:$0xff]
  %v128 = vld [vmem:[%s1 + $0x288] sm:$0xff]
  %v129 = vld [vmem:[%s1 + $0x290] sm:$0xff]
  %v130 = vld [vmem:[%s1 + $0x298] sm:$0xff]
  %v131 = vld [vmem:[%s1 + $0x2a0] sm:$0xff]
  %v132 = vld [vmem:[%s1 + $0x2a8] sm:$0xff]
  %v133 = vld [vmem:[%s1 + $0x2b0] sm:$0xff]
  %v134 = vld [vmem:[%s1 + $0x2b8] sm:$0xff]
  %v135 = vld [vmem:[%s1 + $0x2c0] sm:$0xff]
  %v136 = vld [vmem:[%s1 + $0x2c8] sm:$0xff]
  %v137 = vld [vmem:[%s1 + $0x2d0] sm:$0xff]
  %v138 = vld [vmem:[%s1 + $0x2d8] sm:$0xff]
  %v139 = vld [vmem:[%s1 + $0x2e0] sm:$0xff]
  %v140 = vld [vmem:[%s1 + $0x2e8] sm:$0xff]
  %v141 = vld [vmem:[%s1 + $0x2f0] sm:$0xff]
  %v142 = vld [vmem:[%s1 + $0x2f8] sm:$0xff]
  %v143 = vld [vmem:[%s1 + $0x300] sm:$0xff]
  %v144 = vld [vmem:[%s1 + $0x308] sm:$0xff]
  %v145 = vld [vmem:[%s1 + $0x310] sm:$0xff]
  %v146 = vld [vmem:[%s1 + $0x318] sm:$0xff]
  %v147 = vld [vmem:[%s1 + $0x320] sm:$0xff]
  %v148 = vld [vmem:[%s1 + $0x328] sm:$0xff]
  %v149 = vld [vmem:[%s1 + $0x330] sm:$0xff]
  %v150 = vld [vmem:[%s1 + $0x338] sm:$0xff]
  %v151 = vld [vmem:[%s1 + $0x340] sm:$0xff]
  %v152 = vld [vmem:[%s1 + $0x348] sm:$0xff]
  %v153 = vld [vmem:[%s1 + $0x350] sm:$0xff]
  %v154 = vld [vmem:[%s1 + $0x358] sm:$0xff]
  %v155 = vld [vmem:[%s1 + $0x360] sm:$0xff]
  %v156 = vld [vmem:[%s1 + $0x368] sm:$0xff]
  %v157 = vld [vmem:[%s1 + $0x370] sm:$0xff]
  %v158 = vld [vmem:[%s1 + $0x378] sm:$0xff]
  %v159 = vld [vmem:[%s1 + $0x380] sm:$0xff]
  %v160 = vld [vmem:[%s1 + $0x388] sm:$0xff]
  %v161 = vld [vmem:[%s1 + $0x390] sm:$0xff]
  %v162 = vld [vmem:[%s1 + $0x398] sm:$0xff]
  %v163 = vld [vmem:[%s1 + $0x3a0] sm:$0xff]
  %v164 = vld [vmem:[%s1 + $0x3a8] sm:$0xff]
  %v165 = vld [vmem:[%s1 + $0x3b0] sm:$0xff]
  %v166 = vld [vmem:[%s1 + $0x3b8] sm:$0xff]
  %v167 = vld [vmem:[%s1 + $0x3c0] sm:$0xff]
  %v168 = vld [vmem:[%s1 + $0x3c8] sm:$0xff]
  %v169 = vld [vmem:[%s1 + $0x3d0] sm:$0xff]
  %v170 = vld [vmem:[%s1 + $0x3d8] sm:$0xff]
  %v171 = vld [vmem:[%s1 + $0x3e0] sm:$0xff]
  %v172 = vld [vmem:[%s1 + $0x3e8] sm:$0xff]
  %v173 = vld [vmem:[%s1 + $0x3f0] sm:$0xff]
  %v174 = vld [vmem:[%s1 + $0x3f8] sm:$0xff]
  %v175 = vld [vmem:[%s1 + $0x400] sm:$0xff]
  %v176 = vld [vmem:[%s1 + $0x408] sm:$0xff]
  %v177 = vld [vmem:[%s1 + $0x410] sm:$0xff]
  %v178 = vld [vmem:[%s1 + $0x418] sm:$0xff]
  %v179 = vld [vmem:[%s1 + $0x420] sm:$0xff]
  %v180 = vld [vmem:[%s1 + $0x428] sm:$0xff]
  %v181 = vld [vmem:[%s1 + $0x430] sm:$0xff]
  %v182 = vld [vmem:[%s1 + $0x438] sm:$0xff]
  %v183 = vld [vmem:[%s1 + $0x440] sm:$0xff]
  %v184 = vld [vmem:[%s1 + $0x448] sm:$0xff]
  %v185 = vld [vmem:[%s1 + $0x450] sm:$0xff]
  %v186 = vld [vmem:[%s1 + $0x458] sm:$0xff]
  %v187 = vld [vmem:[%s1 + $0x460] sm:$0xff]
  %v188 = vld [vmem:[%s1 + $0x468] sm:$0xff]
  %v189 = vld [vmem:[%s1 + $0x470] sm:$0xff]
  %v190 = vld [vmem:[%s1 + $0x478] sm:$0xff]
  %v191 = vld [vmem:[%s1 + $0x480] sm:$0xff]
  %v192 = vld [vmem:[%s1 + $0x488] sm:$0xff]
  %v193 = vld [vmem:[%s1 + $0x490] sm:$0xff]
  %v194 = vld [vmem:[%s1 + $0x498] sm:$0xff]
  %v195 = vld [vmem:[%s1 + $0x4a0] sm:$0xff]
  %v196 = vld [vmem:[%s1 + $0x4a8] sm:$0xff]
  %v197 = vld [vmem:[%s1 + $0x4b0] sm:$0xff]
  %v198 = vld [vmem:[%s1 + $0x4b8] sm:$0xff]
  %v199 = vld [vmem:[%s1 + $0x4c0] sm:$0xff]
  %v200 = vld [vmem:[%s1 + $0x4c8] sm:$0xff]
  %v201 = vld [vmem:[%s1 + $0x4d0] sm:$0xff]
  %v202 = vld [vmem:[%s1 + $0x4d8] sm:$0xff]
  %v203 = vld [vmem:[%s1 + $0x4e0] sm:$0xff]
  %v204 = vld [vmem:[%s1 + $0x4e8] sm:$0xff]
  %v205 = vld [vmem:[%s1 + $0x4f0] sm:$0xff]
  %v206 = vld [vmem:[%s1 + $0x4f8] sm:$0xff]
  %v207 = vld [vmem:[%s1 + $0x500] sm:$0xff]
  %v208 = vld [vmem:[%s1 + $0x508] sm:$0xff]
  %v209 = vld [vmem:[%s1 + $0x510] sm:$0xff]
  %v210 = vld [vmem:[%s1 + $0x518] sm:$0xff]
  %v211 = vld [vmem:[%s1 + $0x520] sm:$0xff]
  %v212 = vld [vmem:[%s1 + $0x528] sm:$0xff]
  %v213 = vld [vmem:[%s1 + $0x530] sm:$0xff]
  %v214 = vld [vmem:[%s1 + $0x538] sm:$0xff]
  %v215 = vld [vmem:[%s1 + $0x540] sm:$0xff]
  %v216 = vld [vmem:[%s1 + $0x548] sm:$0xff]
  %v217 = vld [vmem:[%s1 + $0x550] sm:$0xff]
  %v218 = vld [vmem:[%s1 + $0x558] sm:$0xff]
  %v219 = vld [vmem:[%s1 + $0x560] sm:$0xff]
  %v220 = vld [vmem:[%s1 + $0x568] sm:$0xff]
  %v221 = vld [vmem:[%s1 + $0x570] sm:$0xff]
  %v222 = vld [vmem:[%s1 + $0x578] sm:$0xff]
  %v223 = vld [vmem:[%s1 + $0x580] sm:$0xff]
  %v224 = vld [vmem:[%s1 + $0x588] sm:$0xff]
  %v225 = vld [vmem:[%s1 + $0x590] sm:$0xff]
  %v226 = vld [vmem:[%s1 + $0x598] sm:$0xff]
  %v227 = vld [vmem:[%s1 + $0x5a0] sm:$0xff]
  %v228 = vld [vmem:[%s1 + $0x5a8] sm:$0xff]
  %v229 = vld [vmem:[%s1 + $0x5b0] sm:$0xff]
  %v230 = vld [vmem:[%s1 + $0x5b8] sm:$0xff]
  %v231 = vld [vmem:[%s1 + $0x5c0] sm:$0xff]
  %v232 = vld [vmem:[%s1 + $0x5c8] sm:$0xff]
  %v233 = vld [vmem:[%s1 + $0x5d0] sm:$0xff]
  %v234 = vld [vmem:[%s1 + $0x5d8] sm:$0xff]
  %v235 = vld [vmem:[%s1 + $0x5e0] sm:$0xff]
  %v236 = vld [vmem:[%s1 + $0x5e8] sm:$0xff]
  %v237 = vld [vmem:[%s1 + $0x5f0] sm:$0xff]
  %v238 = vld [vmem:[%s1 + $0x5f8] sm:$0xff]
  %v239 = vld [vmem:[%s5] sm:$0xf]
  %v241 = vlaneseq
  %v242 = vshrl.u32 %v241, 7
  %v243 = vsub.s32 0, %v242
  %v244 = vrot.slane %v239, %v243
  %v245 = vlaneseq
  %v246 = vshrl.u32 %v245, 7
  %v247 = vsub.s32 1, %v246
  %v248 = vrot.slane %v239, %v247
  %v249 = vlaneseq
  %v250 = vshrl.u32 %v249, 7
  %v251 = vsub.s32 2, %v250
  %v252 = vrot.slane %v239, %v251
  %v253 = vlaneseq
  %v254 = vshrl.u32 %v253, 7
  %v255 = vsub.s32 3, %v254
  %v256 = vrot.slane %v239, %v255
  %v267 = vunpack.c.l.b16 %v41
  %v268 = vunpack.c.h.b16 %v41
  %v269 = vunpack.c.l.b16 %v42
  %v270 = vunpack.c.h.b16 %v42
  %v271 = vunpack.c.l.b16 %v43
  %v272 = vunpack.c.h.b16 %v43
  %v273 = vunpack.c.l.b16 %v44
  %v274 = vunpack.c.h.b16 %v44
  %v275 = vunpack.c.l.b16 %v45
  %v276 = vunpack.c.h.b16 %v45
  %v277 = vunpack.c.l.b16 %v46
  %v278 = vunpack.c.h.b16 %v46
  %v279 = vpack.c.b16 %v273, %v267
  %v280 = vpack.c.b16 %v274, %v268
  %v281 = vpack.c.b16 %v275, %v269
  %v282 = vpack.c.b16 %v276, %v270
  %v283 = vpack.c.b16 %v277, %v271
  %v284 = vpack.c.b16 %v278, %v272
  %v483 = vunpack.c.l.b16 %v47
  %v484 = vunpack.c.h.b16 %v47
  %v485 = vunpack.c.l.b16 %v48
  %v486 = vunpack.c.h.b16 %v48
  %v487 = vunpack.c.l.b16 %v49
  %v488 = vunpack.c.h.b16 %v49
  %v489 = vunpack.c.l.b16 %v50
  %v490 = vunpack.c.h.b16 %v50
  %v491 = vunpack.c.l.b16 %v51
  %v492 = vunpack.c.h.b16 %v51
  %v493 = vunpack.c.l.b16 %v52
  %v494 = vunpack.c.h.b16 %v52
  %v495 = vunpack.c.l.b16 %v53
  %v496 = vunpack.c.h.b16 %v53
  %v497 = vunpack.c.l.b16 %v54
  %v498 = vunpack.c.h.b16 %v54
  %v499 = vunpack.c.l.b16 %v55
  %v500 = vunpack.c.h.b16 %v55
  %v501 = vunpack.c.l.b16 %v56
  %v502 = vunpack.c.h.b16 %v56
  %v503 = vunpack.c.l.b16 %v57
  %v504 = vunpack.c.h.b16 %v57
  %v505 = vunpack.c.l.b16 %v58
  %v506 = vunpack.c.h.b16 %v58
  %v507 = vunpack.c.l.b16 %v59
  %v508 = vunpack.c.h.b16 %v59
  %v509 = vunpack.c.l.b16 %v60
  %v510 = vunpack.c.h.b16 %v60
  %v511 = vunpack.c.l.b16 %v61
  %v512 = vunpack.c.h.b16 %v61
  %v513 = vunpack.c.l.b16 %v62
  %v514 = vunpack.c.h.b16 %v62
  %v515 = vunpack.c.l.b16 %v63
  %v516 = vunpack.c.h.b16 %v63
  %v517 = vunpack.c.l.b16 %v64
  %v518 = vunpack.c.h.b16 %v64
  %v519 = vunpack.c.l.b16 %v65
  %v520 = vunpack.c.h.b16 %v65
  %v521 = vunpack.c.l.b16 %v66
  %v522 = vunpack.c.h.b16 %v66
  %v523 = vunpack.c.l.b16 %v67
  %v524 = vunpack.c.h.b16 %v67
  %v525 = vunpack.c.l.b16 %v68
  %v526 = vunpack.c.h.b16 %v68
  %v527 = vunpack.c.l.b16 %v69
  %v528 = vunpack.c.h.b16 %v69
  %v529 = vunpack.c.l.b16 %v70
  %v530 = vunpack.c.h.b16 %v70
  %v531 = vunpack.c.l.b16 %v71
  %v532 = vunpack.c.h.b16 %v71
  %v533 = vunpack.c.l.b16 %v72
  %v534 = vunpack.c.h.b16 %v72
  %v535 = vunpack.c.l.b16 %v73
  %v536 = vunpack.c.h.b16 %v73
  %v537 = vunpack.c.l.b16 %v74
  %v538 = vunpack.c.h.b16 %v74
  %v539 = vunpack.c.l.b16 %v75
  %v540 = vunpack.c.h.b16 %v75
  %v541 = vunpack.c.l.b16 %v76
  %v542 = vunpack.c.h.b16 %v76
  %v543 = vunpack.c.l.b16 %v77
  %v544 = vunpack.c.h.b16 %v77
  %v545 = vunpack.c.l.b16 %v78
  %v546 = vunpack.c.h.b16 %v78
  %v547 = vunpack.c.l.b16 %v79
  %v548 = vunpack.c.h.b16 %v79
  %v549 = vunpack.c.l.b16 %v80
  %v550 = vunpack.c.h.b16 %v80
  %v551 = vunpack.c.l.b16 %v81
  %v552 = vunpack.c.h.b16 %v81
  %v553 = vunpack.c.l.b16 %v82
  %v554 = vunpack.c.h.b16 %v82
  %v555 = vunpack.c.l.b16 %v83
  %v556 = vunpack.c.h.b16 %v83
  %v557 = vunpack.c.l.b16 %v84
  %v558 = vunpack.c.h.b16 %v84
  %v559 = vunpack.c.l.b16 %v85
  %v560 = vunpack.c.h.b16 %v85
  %v561 = vunpack.c.l.b16 %v86
  %v562 = vunpack.c.h.b16 %v86
  %v563 = vunpack.c.l.b16 %v87
  %v564 = vunpack.c.h.b16 %v87
  %v565 = vunpack.c.l.b16 %v88
  %v566 = vunpack.c.h.b16 %v88
  %v567 = vunpack.c.l.b16 %v89
  %v568 = vunpack.c.h.b16 %v89
  %v569 = vunpack.c.l.b16 %v90
  %v570 = vunpack.c.h.b16 %v90
  %v571 = vunpack.c.l.b16 %v91
  %v572 = vunpack.c.h.b16 %v91
  %v573 = vunpack.c.l.b16 %v92
  %v574 = vunpack.c.h.b16 %v92
  %v575 = vunpack.c.l.b16 %v93
  %v576 = vunpack.c.h.b16 %v93
  %v577 = vunpack.c.l.b16 %v94
  %v578 = vunpack.c.h.b16 %v94
  %v579 = vunpack.c.l.b16 %v95
  %v580 = vunpack.c.h.b16 %v95
  %v581 = vunpack.c.l.b16 %v96
  %v582 = vunpack.c.h.b16 %v96
  %v583 = vunpack.c.l.b16 %v97
  %v584 = vunpack.c.h.b16 %v97
  %v585 = vunpack.c.l.b16 %v98
  %v586 = vunpack.c.h.b16 %v98
  %v587 = vunpack.c.l.b16 %v99
  %v588 = vunpack.c.h.b16 %v99
  %v589 = vunpack.c.l.b16 %v100
  %v590 = vunpack.c.h.b16 %v100
  %v591 = vunpack.c.l.b16 %v101
  %v592 = vunpack.c.h.b16 %v101
  %v593 = vunpack.c.l.b16 %v102
  %v594 = vunpack.c.h.b16 %v102
  %v595 = vunpack.c.l.b16 %v103
  %v596 = vunpack.c.h.b16 %v103
  %v597 = vunpack.c.l.b16 %v104
  %v598 = vunpack.c.h.b16 %v104
  %v599 = vunpack.c.l.b16 %v105
  %v600 = vunpack.c.h.b16 %v105
  %v601 = vunpack.c.l.b16 %v106
  %v602 = vunpack.c.h.b16 %v106
  %v603 = vunpack.c.l.b16 %v107
  %v604 = vunpack.c.h.b16 %v107
  %v605 = vunpack.c.l.b16 %v108
  %v606 = vunpack.c.h.b16 %v108
  %v607 = vunpack.c.l.b16 %v109
  %v608 = vunpack.c.h.b16 %v109
  %v609 = vunpack.c.l.b16 %v110
  %v610 = vunpack.c.h.b16 %v110
  %v611 = vunpack.c.l.b16 %v111
  %v612 = vunpack.c.h.b16 %v111
  %v613 = vunpack.c.l.b16 %v112
  %v614 = vunpack.c.h.b16 %v112
  %v615 = vunpack.c.l.b16 %v113
  %v616 = vunpack.c.h.b16 %v113
  %v617 = vunpack.c.l.b16 %v114
  %v618 = vunpack.c.h.b16 %v114
  %v619 = vunpack.c.l.b16 %v115
  %v620 = vunpack.c.h.b16 %v115
  %v621 = vunpack.c.l.b16 %v116
  %v622 = vunpack.c.h.b16 %v116
  %v623 = vunpack.c.l.b16 %v117
  %v624 = vunpack.c.h.b16 %v117
  %v625 = vunpack.c.l.b16 %v118
  %v626 = vunpack.c.h.b16 %v118
  %v627 = vunpack.c.l.b16 %v119
  %v628 = vunpack.c.h.b16 %v119
  %v629 = vunpack.c.l.b16 %v120
  %v630 = vunpack.c.h.b16 %v120
  %v631 = vunpack.c.l.b16 %v121
  %v632 = vunpack.c.h.b16 %v121
  %v633 = vunpack.c.l.b16 %v122
  %v634 = vunpack.c.h.b16 %v122
  %v635 = vunpack.c.l.b16 %v123
  %v636 = vunpack.c.h.b16 %v123
  %v637 = vunpack.c.l.b16 %v124
  %v638 = vunpack.c.h.b16 %v124
  %v639 = vunpack.c.l.b16 %v125
  %v640 = vunpack.c.h.b16 %v125
  %v641 = vunpack.c.l.b16 %v126
  %v642 = vunpack.c.h.b16 %v126
  %v643 = vunpack.c.l.b16 %v127
  %v644 = vunpack.c.h.b16 %v127
  %v645 = vunpack.c.l.b16 %v128
  %v646 = vunpack.c.h.b16 %v128
  %v647 = vunpack.c.l.b16 %v129
  %v648 = vunpack.c.h.b16 %v129
  %v649 = vunpack.c.l.b16 %v130
  %v650 = vunpack.c.h.b16 %v130
  %v651 = vunpack.c.l.b16 %v131
  %v652 = vunpack.c.h.b16 %v131
  %v653 = vunpack.c.l.b16 %v132
  %v654 = vunpack.c.h.b16 %v132
  %v655 = vunpack.c.l.b16 %v133
  %v656 = vunpack.c.h.b16 %v133
  %v657 = vunpack.c.l.b16 %v134
  %v658 = vunpack.c.h.b16 %v134
  %v659 = vunpack.c.l.b16 %v135
  %v660 = vunpack.c.h.b16 %v135
  %v661 = vunpack.c.l.b16 %v136
  %v662 = vunpack.c.h.b16 %v136
  %v663 = vunpack.c.l.b16 %v137
  %v664 = vunpack.c.h.b16 %v137
  %v665 = vunpack.c.l.b16 %v138
  %v666 = vunpack.c.h.b16 %v138
  %v667 = vunpack.c.l.b16 %v139
  %v668 = vunpack.c.h.b16 %v139
  %v669 = vunpack.c.l.b16 %v140
  %v670 = vunpack.c.h.b16 %v140
  %v671 = vunpack.c.l.b16 %v141
  %v672 = vunpack.c.h.b16 %v141
  %v673 = vunpack.c.l.b16 %v142
  %v674 = vunpack.c.h.b16 %v142
  %v675 = vunpack.c.l.b16 %v143
  %v676 = vunpack.c.h.b16 %v143
  %v677 = vunpack.c.l.b16 %v144
  %v678 = vunpack.c.h.b16 %v144
  %v679 = vunpack.c.l.b16 %v145
  %v680 = vunpack.c.h.b16 %v145
  %v681 = vunpack.c.l.b16 %v146
  %v682 = vunpack.c.h.b16 %v146
  %v683 = vunpack.c.l.b16 %v147
  %v684 = vunpack.c.h.b16 %v147
  %v685 = vunpack.c.l.b16 %v148
  %v686 = vunpack.c.h.b16 %v148
  %v687 = vunpack.c.l.b16 %v149
  %v688 = vunpack.c.h.b16 %v149
  %v689 = vunpack.c.l.b16 %v150
  %v690 = vunpack.c.h.b16 %v150
  %v691 = vunpack.c.l.b16 %v151
  %v692 = vunpack.c.h.b16 %v151
  %v693 = vunpack.c.l.b16 %v152
  %v694 = vunpack.c.h.b16 %v152
  %v695 = vunpack.c.l.b16 %v153
  %v696 = vunpack.c.h.b16 %v153
  %v697 = vunpack.c.l.b16 %v154
  %v698 = vunpack.c.h.b16 %v154
  %v699 = vunpack.c.l.b16 %v155
  %v700 = vunpack.c.h.b16 %v155
  %v701 = vunpack.c.l.b16 %v156
  %v702 = vunpack.c.h.b16 %v156
  %v703 = vunpack.c.l.b16 %v157
  %v704 = vunpack.c.h.b16 %v157
  %v705 = vunpack.c.l.b16 %v158
  %v706 = vunpack.c.h.b16 %v158
  %v707 = vunpack.c.l.b16 %v159
  %v708 = vunpack.c.h.b16 %v159
  %v709 = vunpack.c.l.b16 %v160
  %v710 = vunpack.c.h.b16 %v160
  %v711 = vunpack.c.l.b16 %v161
  %v712 = vunpack.c.h.b16 %v161
  %v713 = vunpack.c.l.b16 %v162
  %v714 = vunpack.c.h.b16 %v162
  %v715 = vunpack.c.l.b16 %v163
  %v716 = vunpack.c.h.b16 %v163
  %v717 = vunpack.c.l.b16 %v164
  %v718 = vunpack.c.h.b16 %v164
  %v719 = vunpack.c.l.b16 %v165
  %v720 = vunpack.c.h.b16 %v165
  %v721 = vunpack.c.l.b16 %v166
  %v722 = vunpack.c.h.b16 %v166
  %v723 = vunpack.c.l.b16 %v167
  %v724 = vunpack.c.h.b16 %v167
  %v725 = vunpack.c.l.b16 %v168
  %v726 = vunpack.c.h.b16 %v168
  %v727 = vunpack.c.l.b16 %v169
  %v728 = vunpack.c.h.b16 %v169
  %v729 = vunpack.c.l.b16 %v170
  %v730 = vunpack.c.h.b16 %v170
  %v731 = vunpack.c.l.b16 %v171
  %v732 = vunpack.c.h.b16 %v171
  %v733 = vunpack.c.l.b16 %v172
  %v734 = vunpack.c.h.b16 %v172
  %v735 = vunpack.c.l.b16 %v173
  %v736 = vunpack.c.h.b16 %v173
  %v737 = vunpack.c.l.b16 %v174
  %v738 = vunpack.c.h.b16 %v174
  %v739 = vunpack.c.l.b16 %v175
  %v740 = vunpack.c.h.b16 %v175
  %v741 = vunpack.c.l.b16 %v176
  %v742 = vunpack.c.h.b16 %v176
  %v743 = vunpack.c.l.b16 %v177
  %v744 = vunpack.c.h.b16 %v177
  %v745 = vunpack.c.l.b16 %v178
  %v746 = vunpack.c.h.b16 %v178
  %v747 = vunpack.c.l.b16 %v179
  %v748 = vunpack.c.h.b16 %v179
  %v749 = vunpack.c.l.b16 %v180
  %v750 = vunpack.c.h.b16 %v180
  %v751 = vunpack.c.l.b16 %v181
  %v752 = vunpack.c.h.b16 %v181
  %v753 = vunpack.c.l.b16 %v182
  %v754 = vunpack.c.h.b16 %v182
  %v755 = vunpack.c.l.b16 %v183
  %v756 = vunpack.c.h.b16 %v183
  %v757 = vunpack.c.l.b16 %v184
  %v758 = vunpack.c.h.b16 %v184
  %v759 = vunpack.c.l.b16 %v185
  %v760 = vunpack.c.h.b16 %v185
  %v761 = vunpack.c.l.b16 %v186
  %v762 = vunpack.c.h.b16 %v186
  %v763 = vunpack.c.l.b16 %v187
  %v764 = vunpack.c.h.b16 %v187
  %v765 = vunpack.c.l.b16 %v188
  %v766 = vunpack.c.h.b16 %v188
  %v767 = vunpack.c.l.b16 %v189
  %v768 = vunpack.c.h.b16 %v189
  %v769 = vunpack.c.l.b16 %v190
  %v770 = vunpack.c.h.b16 %v190
  %v771 = vunpack.c.l.b16 %v191
  %v772 = vunpack.c.h.b16 %v191
  %v773 = vunpack.c.l.b16 %v192
  %v774 = vunpack.c.h.b16 %v192
  %v775 = vunpack.c.l.b16 %v193
  %v776 = vunpack.c.h.b16 %v193
  %v777 = vunpack.c.l.b16 %v194
  %v778 = vunpack.c.h.b16 %v194
  %v779 = vunpack.c.l.b16 %v195
  %v780 = vunpack.c.h.b16 %v195
  %v781 = vunpack.c.l.b16 %v196
  %v782 = vunpack.c.h.b16 %v196
  %v783 = vunpack.c.l.b16 %v197
  %v784 = vunpack.c.h.b16 %v197
  %v785 = vunpack.c.l.b16 %v198
  %v786 = vunpack.c.h.b16 %v198
  %v787 = vunpack.c.l.b16 %v199
  %v788 = vunpack.c.h.b16 %v199
  %v789 = vunpack.c.l.b16 %v200
  %v790 = vunpack.c.h.b16 %v200
  %v791 = vunpack.c.l.b16 %v201
  %v792 = vunpack.c.h.b16 %v201
  %v793 = vunpack.c.l.b16 %v202
  %v794 = vunpack.c.h.b16 %v202
  %v795 = vunpack.c.l.b16 %v203
  %v796 = vunpack.c.h.b16 %v203
  %v797 = vunpack.c.l.b16 %v204
  %v798 = vunpack.c.h.b16 %v204
  %v799 = vunpack.c.l.b16 %v205
  %v800 = vunpack.c.h.b16 %v205
  %v801 = vunpack.c.l.b16 %v206
  %v802 = vunpack.c.h.b16 %v206
  %v803 = vunpack.c.l.b16 %v207
  %v804 = vunpack.c.h.b16 %v207
  %v805 = vunpack.c.l.b16 %v208
  %v806 = vunpack.c.h.b16 %v208
  %v807 = vunpack.c.l.b16 %v209
  %v808 = vunpack.c.h.b16 %v209
  %v809 = vunpack.c.l.b16 %v210
  %v810 = vunpack.c.h.b16 %v210
  %v811 = vunpack.c.l.b16 %v211
  %v812 = vunpack.c.h.b16 %v211
  %v813 = vunpack.c.l.b16 %v212
  %v814 = vunpack.c.h.b16 %v212
  %v815 = vunpack.c.l.b16 %v213
  %v816 = vunpack.c.h.b16 %v213
  %v817 = vunpack.c.l.b16 %v214
  %v818 = vunpack.c.h.b16 %v214
  %v819 = vunpack.c.l.b16 %v215
  %v820 = vunpack.c.h.b16 %v215
  %v821 = vunpack.c.l.b16 %v216
  %v822 = vunpack.c.h.b16 %v216
  %v823 = vunpack.c.l.b16 %v217
  %v824 = vunpack.c.h.b16 %v217
  %v825 = vunpack.c.l.b16 %v218
  %v826 = vunpack.c.h.b16 %v218
  %v827 = vunpack.c.l.b16 %v219
  %v828 = vunpack.c.h.b16 %v219
  %v829 = vunpack.c.l.b16 %v220
  %v830 = vunpack.c.h.b16 %v220
  %v831 = vunpack.c.l.b16 %v221
  %v832 = vunpack.c.h.b16 %v221
  %v833 = vunpack.c.l.b16 %v222
  %v834 = vunpack.c.h.b16 %v222
  %v835 = vunpack.c.l.b16 %v223
  %v836 = vunpack.c.h.b16 %v223
  %v837 = vunpack.c.l.b16 %v224
  %v838 = vunpack.c.h.b16 %v224
  %v839 = vunpack.c.l.b16 %v225
  %v840 = vunpack.c.h.b16 %v225
  %v841 = vunpack.c.l.b16 %v226
  %v842 = vunpack.c.h.b16 %v226
  %v843 = vunpack.c.l.b16 %v227
  %v844 = vunpack.c.h.b16 %v227
  %v845 = vunpack.c.l.b16 %v228
  %v846 = vunpack.c.h.b16 %v228
  %v847 = vunpack.c.l.b16 %v229
  %v848 = vunpack.c.h.b16 %v229
  %v849 = vunpack.c.l.b16 %v230
  %v850 = vunpack.c.h.b16 %v230
  %v851 = vunpack.c.l.b16 %v231
  %v852 = vunpack.c.h.b16 %v231
  %v853 = vunpack.c.l.b16 %v232
  %v854 = vunpack.c.h.b16 %v232
  %v855 = vunpack.c.l.b16 %v233
  %v856 = vunpack.c.h.b16 %v233
  %v857 = vunpack.c.l.b16 %v234
  %v858 = vunpack.c.h.b16 %v234
  %v859 = vunpack.c.l.b16 %v235
  %v860 = vunpack.c.h.b16 %v235
  %v861 = vunpack.c.l.b16 %v236
  %v862 = vunpack.c.h.b16 %v236
  %v863 = vunpack.c.l.b16 %v237
  %v864 = vunpack.c.h.b16 %v237
  %v865 = vunpack.c.l.b16 %v238
  %v866 = vunpack.c.h.b16 %v238
  %v867 = vpack.c.b16 %v487, %v483
  %v868 = vpack.c.b16 %v488, %v484
  %v869 = vpack.c.b16 %v489, %v485
  %v870 = vpack.c.b16 %v490, %v486
  %v871 = vpack.c.b16 %v495, %v491
  %v872 = vpack.c.b16 %v496, %v492
  %v873 = vpack.c.b16 %v497, %v493
  %v874 = vpack.c.b16 %v498, %v494
  %v875 = vpack.c.b16 %v503, %v499
  %v876 = vpack.c.b16 %v504, %v500
  %v877 = vpack.c.b16 %v505, %v501
  %v878 = vpack.c.b16 %v506, %v502
  %v879 = vpack.c.b16 %v511, %v507
  %v880 = vpack.c.b16 %v512, %v508
  %v881 = vpack.c.b16 %v513, %v509
  %v882 = vpack.c.b16 %v514, %v510
  %v883 = vpack.c.b16 %v519, %v515
  %v884 = vpack.c.b16 %v520, %v516
  %v885 = vpack.c.b16 %v521, %v517
  %v886 = vpack.c.b16 %v522, %v518
  %v887 = vpack.c.b16 %v527, %v523
  %v888 = vpack.c.b16 %v528, %v524
  %v889 = vpack.c.b16 %v529, %v525
  %v890 = vpack.c.b16 %v530, %v526
  %v891 = vpack.c.b16 %v535, %v531
  %v892 = vpack.c.b16 %v536, %v532
  %v893 = vpack.c.b16 %v537, %v533
  %v894 = vpack.c.b16 %v538, %v534
  %v895 = vpack.c.b16 %v543, %v539
  %v896 = vpack.c.b16 %v544, %v540
  %v897 = vpack.c.b16 %v545, %v541
  %v898 = vpack.c.b16 %v546, %v542
  %v899 = vpack.c.b16 %v551, %v547
  %v900 = vpack.c.b16 %v552, %v548
  %v901 = vpack.c.b16 %v553, %v549
  %v902 = vpack.c.b16 %v554, %v550
  %v903 = vpack.c.b16 %v559, %v555
  %v904 = vpack.c.b16 %v560, %v556
  %v905 = vpack.c.b16 %v561, %v557
  %v906 = vpack.c.b16 %v562, %v558
  %v907 = vpack.c.b16 %v567, %v563
  %v908 = vpack.c.b16 %v568, %v564
  %v909 = vpack.c.b16 %v569, %v565
  %v910 = vpack.c.b16 %v570, %v566
  %v911 = vpack.c.b16 %v575, %v571
  %v912 = vpack.c.b16 %v576, %v572
  %v913 = vpack.c.b16 %v577, %v573
  %v914 = vpack.c.b16 %v578, %v574
  %v915 = vpack.c.b16 %v583, %v579
  %v916 = vpack.c.b16 %v584, %v580
  %v917 = vpack.c.b16 %v585, %v581
  %v918 = vpack.c.b16 %v586, %v582
  %v919 = vpack.c.b16 %v591, %v587
  %v920 = vpack.c.b16 %v592, %v588
  %v921 = vpack.c.b16 %v593, %v589
  %v922 = vpack.c.b16 %v594, %v590
  %v923 = vpack.c.b16 %v599, %v595
  %v924 = vpack.c.b16 %v600, %v596
  %v925 = vpack.c.b16 %v601, %v597
  %v926 = vpack.c.b16 %v602, %v598
  %v927 = vpack.c.b16 %v607, %v603
  %v928 = vpack.c.b16 %v608, %v604
  %v929 = vpack.c.b16 %v609, %v605
  %v930 = vpack.c.b16 %v610, %v606
  %v931 = vpack.c.b16 %v615, %v611
  %v932 = vpack.c.b16 %v616, %v612
  %v933 = vpack.c.b16 %v617, %v613
  %v934 = vpack.c.b16 %v618, %v614
  %v935 = vpack.c.b16 %v623, %v619
  %v936 = vpack.c.b16 %v624, %v620
  %v937 = vpack.c.b16 %v625, %v621
  %v938 = vpack.c.b16 %v626, %v622
  %v939 = vpack.c.b16 %v631, %v627
  %v940 = vpack.c.b16 %v632, %v628
  %v941 = vpack.c.b16 %v633, %v629
  %v942 = vpack.c.b16 %v634, %v630
  %v943 = vpack.c.b16 %v639, %v635
  %v944 = vpack.c.b16 %v640, %v636
  %v945 = vpack.c.b16 %v641, %v637
  %v946 = vpack.c.b16 %v642, %v638
  %v947 = vpack.c.b16 %v647, %v643
  %v948 = vpack.c.b16 %v648, %v644
  %v949 = vpack.c.b16 %v649, %v645
  %v950 = vpack.c.b16 %v650, %v646
  %v951 = vpack.c.b16 %v655, %v651
  %v952 = vpack.c.b16 %v656, %v652
  %v953 = vpack.c.b16 %v657, %v653
  %v954 = vpack.c.b16 %v658, %v654
  %v955 = vpack.c.b16 %v663, %v659
  %v956 = vpack.c.b16 %v664, %v660
  %v957 = vpack.c.b16 %v665, %v661
  %v958 = vpack.c.b16 %v666, %v662
  %v959 = vpack.c.b16 %v671, %v667
  %v960 = vpack.c.b16 %v672, %v668
  %v961 = vpack.c.b16 %v673, %v669
  %v962 = vpack.c.b16 %v674, %v670
  %v963 = vpack.c.b16 %v679, %v675
  %v964 = vpack.c.b16 %v680, %v676
  %v965 = vpack.c.b16 %v681, %v677
  %v966 = vpack.c.b16 %v682, %v678
  %v967 = vpack.c.b16 %v687, %v683
  %v968 = vpack.c.b16 %v688, %v684
  %v969 = vpack.c.b16 %v689, %v685
  %v970 = vpack.c.b16 %v690, %v686
  %v971 = vpack.c.b16 %v695, %v691
  %v972 = vpack.c.b16 %v696, %v692
  %v973 = vpack.c.b16 %v697, %v693
  %v974 = vpack.c.b16 %v698, %v694
  %v975 = vpack.c.b16 %v703, %v699
  %v976 = vpack.c.b16 %v704, %v700
  %v977 = vpack.c.b16 %v705, %v701
  %v978 = vpack.c.b16 %v706, %v702
  %v979 = vpack.c.b16 %v711, %v707
  %v980 = vpack.c.b16 %v712, %v708
  %v981 = vpack.c.b16 %v713, %v709
  %v982 = vpack.c.b16 %v714, %v710
  %v983 = vpack.c.b16 %v719, %v715
  %v984 = vpack.c.b16 %v720, %v716
  %v985 = vpack.c.b16 %v721, %v717
  %v986 = vpack.c.b16 %v722, %v718
  %v987 = vpack.c.b16 %v727, %v723
  %v988 = vpack.c.b16 %v728, %v724
  %v989 = vpack.c.b16 %v729, %v725
  %v990 = vpack.c.b16 %v730, %v726
  %v991 = vpack.c.b16 %v735, %v731
  %v992 = vpack.c.b16 %v736, %v732
  %v993 = vpack.c.b16 %v737, %v733
  %v994 = vpack.c.b16 %v738, %v734
  %v995 = vpack.c.b16 %v743, %v739
  %v996 = vpack.c.b16 %v744, %v740
  %v997 = vpack.c.b16 %v745, %v741
  %v998 = vpack.c.b16 %v746, %v742
  %v999 = vpack.c.b16 %v751, %v747
  %v1000 = vpack.c.b16 %v752, %v748
  %v1001 = vpack.c.b16 %v753, %v749
  %v1002 = vpack.c.b16 %v754, %v750
  %v1003 = vpack.c.b16 %v759, %v755
  %v1004 = vpack.c.b16 %v760, %v756
  %v1005 = vpack.c.b16 %v761, %v757
  %v1006 = vpack.c.b16 %v762, %v758
  %v1007 = vpack.c.b16 %v767, %v763
  %v1008 = vpack.c.b16 %v768, %v764
  %v1009 = vpack.c.b16 %v769, %v765
  %v1010 = vpack.c.b16 %v770, %v766
  %v1011 = vpack.c.b16 %v775, %v771
  %v1012 = vpack.c.b16 %v776, %v772
  %v1013 = vpack.c.b16 %v777, %v773
  %v1014 = vpack.c.b16 %v778, %v774
  %v1015 = vpack.c.b16 %v783, %v779
  %v1016 = vpack.c.b16 %v784, %v780
  %v1017 = vpack.c.b16 %v785, %v781
  %v1018 = vpack.c.b16 %v786, %v782
  %v1019 = vpack.c.b16 %v791, %v787
  %v1020 = vpack.c.b16 %v792, %v788
  %v1021 = vpack.c.b16 %v793, %v789
  %v1022 = vpack.c.b16 %v794, %v790
  %v1023 = vpack.c.b16 %v799, %v795
  %v1024 = vpack.c.b16 %v800, %v796
  %v1025 = vpack.c.b16 %v801, %v797
  %v1026 = vpack.c.b16 %v802, %v798
  %v1027 = vpack.c.b16 %v807, %v803
  %v1028 = vpack.c.b16 %v808, %v804
  %v1029 = vpack.c.b16 %v809, %v805
  %v1030 = vpack.c.b16 %v810, %v806
  %v1031 = vpack.c.b16 %v815, %v811
  %v1032 = vpack.c.b16 %v816, %v812
  %v1033 = vpack.c.b16 %v817, %v813
  %v1034 = vpack.c.b16 %v818, %v814
  %v1035 = vpack.c.b16 %v823, %v819
  %v1036 = vpack.c.b16 %v824, %v820
  %v1037 = vpack.c.b16 %v825, %v821
  %v1038 = vpack.c.b16 %v826, %v822
  %v1039 = vpack.c.b16 %v831, %v827
  %v1040 = vpack.c.b16 %v832, %v828
  %v1041 = vpack.c.b16 %v833, %v829
  %v1042 = vpack.c.b16 %v834, %v830
  %v1043 = vpack.c.b16 %v839, %v835
  %v1044 = vpack.c.b16 %v840, %v836
  %v1045 = vpack.c.b16 %v841, %v837
  %v1046 = vpack.c.b16 %v842, %v838
  %v1047 = vpack.c.b16 %v847, %v843
  %v1048 = vpack.c.b16 %v848, %v844
  %v1049 = vpack.c.b16 %v849, %v845
  %v1050 = vpack.c.b16 %v850, %v846
  %v1051 = vpack.c.b16 %v855, %v851
  %v1052 = vpack.c.b16 %v856, %v852
  %v1053 = vpack.c.b16 %v857, %v853
  %v1054 = vpack.c.b16 %v858, %v854
  %v1055 = vpack.c.b16 %v863, %v859
  %v1056 = vpack.c.b16 %v864, %v860
  %v1057 = vpack.c.b16 %v865, %v861
  %v1058 = vpack.c.b16 %v866, %v862
  %1251 = vmatprep.subr.bf16.mxu0 %v868
  %1252 = vmatpush1.bf16.msra.mxu0 %v867
  %1253 = vmatprep.subr.bf16.mxu0 %v872
  %1254 = vmatpush1.bf16.msra.mxu0 %v871
  %1255 = vmatprep.subr.bf16.mxu0 %v876
  %1256 = vmatpush1.bf16.msra.mxu0 %v875
  %1257 = vmatprep.subr.bf16.mxu0 %v880
  %1258 = vmatpush1.bf16.msra.mxu0 %v879
  %1259 = vmatprep.subr.bf16.mxu0 %v884
  %1260 = vmatpush1.bf16.msra.mxu0 %v883
  %1261 = vmatprep.subr.bf16.mxu0 %v888
  %1262 = vmatpush1.bf16.msra.mxu0 %v887
  %1263 = vmatprep.subr.bf16.mxu0 %v892
  %1264 = vmatpush1.bf16.msra.mxu0 %v891
  %1265 = vmatprep.subr.bf16.mxu0 %v896
  %1266 = vmatpush1.bf16.msra.mxu0 %v895
  %1267 = vmatprep.subr.bf16.mxu0 %v900
  %1268 = vmatpush1.bf16.msra.mxu0 %v899
  %1269 = vmatprep.subr.bf16.mxu0 %v904
  %1270 = vmatpush1.bf16.msra.mxu0 %v903
  %1271 = vmatprep.subr.bf16.mxu0 %v908
  %1272 = vmatpush1.bf16.msra.mxu0 %v907
  %1273 = vmatprep.subr.bf16.mxu0 %v912
  %1274 = vmatpush1.bf16.msra.mxu0 %v911
  %1275 = vmatprep.subr.bf16.mxu0 %v916
  %1276 = vmatpush1.bf16.msra.mxu0 %v915
  %1277 = vmatprep.subr.bf16.mxu0 %v920
  %1278 = vmatpush1.bf16.msra.mxu0 %v919
  %1279 = vmatprep.subr.bf16.mxu0 %v924
  %1280 = vmatpush1.bf16.msra.mxu0 %v923
  %1281 = vmatprep.subr.bf16.mxu0 %v928
  %1282 = vmatpush1.bf16.msra.mxu0 %v927
  %1283 = vmatprep.mubr.bf16.mxu0 %v280
  %1284 = vmatmul.mubr.bf16.gmra.mrb[0].mxu0 %v279
  %v1285 = vpop.f32.mrb[0].mxu0
  %v1286 = vadd.f32 %v244, %v1285
  %v1287 = vpop.f32.mrb[0].mxu0
  %v1288 = vadd.f32 %v248, %v1287
  %v1289 = vpop.f32.mrb[0].mxu0
  %v1290 = vadd.f32 %v244, %v1289
  %v1291 = vpop.f32.mrb[0].mxu0
  %v1292 = vadd.f32 %v248, %v1291
  %1293 = vdwg.mxu0
  %1294 = vmatprep.subr.bf16.mxu0 %v932
  %1295 = vmatpush1.bf16.msra.mxu0 %v931
  %1296 = vmatprep.subr.bf16.mxu0 %v936
  %1297 = vmatpush1.bf16.msra.mxu0 %v935
  %1298 = vmatprep.subr.bf16.mxu0 %v940
  %1299 = vmatpush1.bf16.msra.mxu0 %v939
  %1300 = vmatprep.subr.bf16.mxu0 %v944
  %1301 = vmatpush1.bf16.msra.mxu0 %v943
  %1302 = vmatprep.subr.bf16.mxu0 %v948
  %1303 = vmatpush1.bf16.msra.mxu0 %v947
  %1304 = vmatprep.subr.bf16.mxu0 %v952
  %1305 = vmatpush1.bf16.msra.mxu0 %v951
  %1306 = vmatprep.subr.bf16.mxu0 %v956
  %1307 = vmatpush1.bf16.msra.mxu0 %v955
  %1308 = vmatprep.subr.bf16.mxu0 %v960
  %1309 = vmatpush1.bf16.msra.mxu0 %v959
  %1310 = vmatprep.subr.bf16.mxu0 %v964
  %1311 = vmatpush1.bf16.msra.mxu0 %v963
  %1312 = vmatprep.subr.bf16.mxu0 %v968
  %1313 = vmatpush1.bf16.msra.mxu0 %v967
  %1314 = vmatprep.subr.bf16.mxu0 %v972
  %1315 = vmatpush1.bf16.msra.mxu0 %v971
  %1316 = vmatprep.subr.bf16.mxu0 %v976
  %1317 = vmatpush1.bf16.msra.mxu0 %v975
  %1318 = vmatprep.subr.bf16.mxu0 %v980
  %1319 = vmatpush1.bf16.msra.mxu0 %v979
  %1320 = vmatprep.subr.bf16.mxu0 %v984
  %1321 = vmatpush1.bf16.msra.mxu0 %v983
  %1322 = vmatprep.subr.bf16.mxu0 %v988
  %1323 = vmatpush1.bf16.msra.mxu0 %v987
  %1324 = vmatprep.subr.bf16.mxu0 %v992
  %1325 = vmatpush1.bf16.msra.mxu0 %v991
  %1326 = vmatprep.mubr.bf16.mxu0 %v282
  %1327 = vmatmul.mubr.bf16.gmra.mrb[0].mxu0 %v281
  %v1328 = vpop.f32.mrb[0].mxu0
  %v1329 = vadd.f32 %v1286, %v1328
  %v1330 = vpop.f32.mrb[0].mxu0
  %v1331 = vadd.f32 %v1288, %v1330
  %v1332 = vpop.f32.mrb[0].mxu0
  %v1333 = vadd.f32 %v1290, %v1332
  %v1334 = vpop.f32.mrb[0].mxu0
  %v1335 = vadd.f32 %v1292, %v1334
  %1336 = vdwg.mxu0
  %1337 = vmatprep.subr.bf16.mxu0 %v996
  %1338 = vmatpush1.bf16.msra.mxu0 %v995
  %1339 = vmatprep.subr.bf16.mxu0 %v1000
  %1340 = vmatpush1.bf16.msra.mxu0 %v999
  %1341 = vmatprep.subr.bf16.mxu0 %v1004
  %1342 = vmatpush1.bf16.msra.mxu0 %v1003
  %1343 = vmatprep.subr.bf16.mxu0 %v1008
  %1344 = vmatpush1.bf16.msra.mxu0 %v1007
  %1345 = vmatprep.subr.bf16.mxu0 %v1012
  %1346 = vmatpush1.bf16.msra.mxu0 %v1011
  %1347 = vmatprep.subr.bf16.mxu0 %v1016
  %1348 = vmatpush1.bf16.msra.mxu0 %v1015
  %1349 = vmatprep.subr.bf16.mxu0 %v1020
  %1350 = vmatpush1.bf16.msra.mxu0 %v1019
  %1351 = vmatprep.subr.bf16.mxu0 %v1024
  %1352 = vmatpush1.bf16.msra.mxu0 %v1023
  %1353 = vmatprep.subr.bf16.mxu0 %v1028
  %1354 = vmatpush1.bf16.msra.mxu0 %v1027
  %1355 = vmatprep.subr.bf16.mxu0 %v1032
  %1356 = vmatpush1.bf16.msra.mxu0 %v1031
  %1357 = vmatprep.subr.bf16.mxu0 %v1036
  %1358 = vmatpush1.bf16.msra.mxu0 %v1035
  %1359 = vmatprep.subr.bf16.mxu0 %v1040
  %1360 = vmatpush1.bf16.msra.mxu0 %v1039
  %1361 = vmatprep.subr.bf16.mxu0 %v1044
  %1362 = vmatpush1.bf16.msra.mxu0 %v1043
  %1363 = vmatprep.subr.bf16.mxu0 %v1048
  %1364 = vmatpush1.bf16.msra.mxu0 %v1047
  %1365 = vmatprep.subr.bf16.mxu0 %v1052
  %1366 = vmatpush1.bf16.msra.mxu0 %v1051
  %1367 = vmatprep.subr.bf16.mxu0 %v1056
  %1368 = vmatpush1.bf16.msra.mxu0 %v1055
  %1369 = vmatprep.mubr.bf16.mxu0 %v284
  %1370 = vmatmul.mubr.bf16.gmra.mrb[0].mxu0 %v283
  %v1371 = vpop.f32.mrb[0].mxu0
  %v1372 = vadd.f32 %v1329, %v1371
  %v1373 = vpop.f32.mrb[0].mxu0
  %v1374 = vadd.f32 %v1331, %v1373
  %v1375 = vpop.f32.mrb[0].mxu0
  %v1376 = vadd.f32 %v1333, %v1375
  %v1377 = vpop.f32.mrb[0].mxu0
  %v1378 = vadd.f32 %v1335, %v1377
  %1379 = vdwg.mxu0
  %1380 = vmatprep.subr.bf16.mxu0 %v870
  %1381 = vmatpush1.bf16.msra.mxu0 %v869
  %1382 = vmatprep.subr.bf16.mxu0 %v874
  %1383 = vmatpush1.bf16.msra.mxu0 %v873
  %1384 = vmatprep.subr.bf16.mxu0 %v878
  %1385 = vmatpush1.bf16.msra.mxu0 %v877
  %1386 = vmatprep.subr.bf16.mxu0 %v882
  %1387 = vmatpush1.bf16.msra.mxu0 %v881
  %1388 = vmatprep.subr.bf16.mxu0 %v886
  %1389 = vmatpush1.bf16.msra.mxu0 %v885
  %1390 = vmatprep.subr.bf16.mxu0 %v890
  %1391 = vmatpush1.bf16.msra.mxu0 %v889
  %1392 = vmatprep.subr.bf16.mxu0 %v894
  %1393 = vmatpush1.bf16.msra.mxu0 %v893
  %1394 = vmatprep.subr.bf16.mxu0 %v898
  %1395 = vmatpush1.bf16.msra.mxu0 %v897
  %1396 = vmatprep.subr.bf16.mxu0 %v902
  %1397 = vmatpush1.bf16.msra.mxu0 %v901
  %1398 = vmatprep.subr.bf16.mxu0 %v906
  %1399 = vmatpush1.bf16.msra.mxu0 %v905
  %1400 = vmatprep.subr.bf16.mxu0 %v910
  %1401 = vmatpush1.bf16.msra.mxu0 %v909
  %1402 = vmatprep.subr.bf16.mxu0 %v914
  %1403 = vmatpush1.bf16.msra.mxu0 %v913
  %1404 = vmatprep.subr.bf16.mxu0 %v918
  %1405 = vmatpush1.bf16.msra.mxu0 %v917
  %1406 = vmatprep.subr.bf16.mxu0 %v922
  %1407 = vmatpush1.bf16.msra.mxu0 %v921
  %1408 = vmatprep.subr.bf16.mxu0 %v926
  %1409 = vmatpush1.bf16.msra.mxu0 %v925
  %1410 = vmatprep.subr.bf16.mxu0 %v930
  %1411 = vmatpush1.bf16.msra.mxu0 %v929
  %1412 = vmatprep.mubr.bf16.mxu0 %v280
  %1413 = vmatmul.mubr.bf16.gmra.mrb[0].mxu0 %v279
  %v1414 = vpop.f32.mrb[0].mxu0
  %v1415 = vadd.f32 %v252, %v1414
  %v1416 = vpop.f32.mrb[0].mxu0
  %v1417 = vadd.f32 %v256, %v1416
  %v1418 = vpop.f32.mrb[0].mxu0
  %v1419 = vadd.f32 %v252, %v1418
  %v1420 = vpop.f32.mrb[0].mxu0
  %v1421 = vadd.f32 %v256, %v1420
  %1422 = vdwg.mxu0
  %1423 = vmatprep.subr.bf16.mxu0 %v934
  %1424 = vmatpush1.bf16.msra.mxu0 %v933
  %1425 = vmatprep.subr.bf16.mxu0 %v938
  %1426 = vmatpush1.bf16.msra.mxu0 %v937
  %1427 = vmatprep.subr.bf16.mxu0 %v942
  %1428 = vmatpush1.bf16.msra.mxu0 %v941
  %1429 = vmatprep.subr.bf16.mxu0 %v946
  %1430 = vmatpush1.bf16.msra.mxu0 %v945
  %1431 = vmatprep.subr.bf16.mxu0 %v950
  %1432 = vmatpush1.bf16.msra.mxu0 %v949
  %1433 = vmatprep.subr.bf16.mxu0 %v954
  %1434 = vmatpush1.bf16.msra.mxu0 %v953
  %1435 = vmatprep.subr.bf16.mxu0 %v958
  %1436 = vmatpush1.bf16.msra.mxu0 %v957
  %1437 = vmatprep.subr.bf16.mxu0 %v962
  %1438 = vmatpush1.bf16.msra.mxu0 %v961
  %1439 = vmatprep.subr.bf16.mxu0 %v966
  %1440 = vmatpush1.bf16.msra.mxu0 %v965
  %1441 = vmatprep.subr.bf16.mxu0 %v970
  %1442 = vmatpush1.bf16.msra.mxu0 %v969
  %1443 = vmatprep.subr.bf16.mxu0 %v974
  %1444 = vmatpush1.bf16.msra.mxu0 %v973
  %1445 = vmatprep.subr.bf16.mxu0 %v978
  %1446 = vmatpush1.bf16.msra.mxu0 %v977
  %1447 = vmatprep.subr.bf16.mxu0 %v982
  %1448 = vmatpush1.bf16.msra.mxu0 %v981
  %1449 = vmatprep.subr.bf16.mxu0 %v986
  %1450 = vmatpush1.bf16.msra.mxu0 %v985
  %1451 = vmatprep.subr.bf16.mxu0 %v990
  %1452 = vmatpush1.bf16.msra.mxu0 %v989
  %1453 = vmatprep.subr.bf16.mxu0 %v994
  %1454 = vmatpush1.bf16.msra.mxu0 %v993
  %1455 = vmatprep.mubr.bf16.mxu0 %v282
  %1456 = vmatmul.mubr.bf16.gmra.mrb[0].mxu0 %v281
  %v1457 = vpop.f32.mrb[0].mxu0
  %v1458 = vadd.f32 %v1415, %v1457
  %v1459 = vpop.f32.mrb[0].mxu0
  %v1460 = vadd.f32 %v1417, %v1459
  %v1461 = vpop.f32.mrb[0].mxu0
  %v1462 = vadd.f32 %v1419, %v1461
  %v1463 = vpop.f32.mrb[0].mxu0
  %v1464 = vadd.f32 %v1421, %v1463
  %1465 = vdwg.mxu0
  %1466 = vmatprep.subr.bf16.mxu0 %v998
  %1467 = vmatpush1.bf16.msra.mxu0 %v997
  %1468 = vmatprep.subr.bf16.mxu0 %v1002
  %1469 = vmatpush1.bf16.msra.mxu0 %v1001
  %1470 = vmatprep.subr.bf16.mxu0 %v1006
  %1471 = vmatpush1.bf16.msra.mxu0 %v1005
  %1472 = vmatprep.subr.bf16.mxu0 %v1010
  %1473 = vmatpush1.bf16.msra.mxu0 %v1009
  %1474 = vmatprep.subr.bf16.mxu0 %v1014
  %1475 = vmatpush1.bf16.msra.mxu0 %v1013
  %1476 = vmatprep.subr.bf16.mxu0 %v1018
  %1477 = vmatpush1.bf16.msra.mxu0 %v1017
  %1478 = vmatprep.subr.bf16.mxu0 %v1022
  %1479 = vmatpush1.bf16.msra.mxu0 %v1021
  %1480 = vmatprep.subr.bf16.mxu0 %v1026
  %1481 = vmatpush1.bf16.msra.mxu0 %v1025
  %1482 = vmatprep.subr.bf16.mxu0 %v1030
  %1483 = vmatpush1.bf16.msra.mxu0 %v1029
  %1484 = vmatprep.subr.bf16.mxu0 %v1034
  %1485 = vmatpush1.bf16.msra.mxu0 %v1033
  %1486 = vmatprep.subr.bf16.mxu0 %v1038
  %1487 = vmatpush1.bf16.msra.mxu0 %v1037
  %1488 = vmatprep.subr.bf16.mxu0 %v1042
  %1489 = vmatpush1.bf16.msra.mxu0 %v1041
  %1490 = vmatprep.subr.bf16.mxu0 %v1046
  %1491 = vmatpush1.bf16.msra.mxu0 %v1045
  %1492 = vmatprep.subr.bf16.mxu0 %v1050
  %1493 = vmatpush1.bf16.msra.mxu0 %v1049
  %1494 = vmatprep.subr.bf16.mxu0 %v1054
  %1495 = vmatpush1.bf16.msra.mxu0 %v1053
  %1496 = vmatprep.subr.bf16.mxu0 %v1058
  %1497 = vmatpush1.bf16.msra.mxu0 %v1057
  %1498 = vmatprep.mubr.bf16.mxu0 %v284
  %1499 = vmatmul.mubr.bf16.gmra.mrb[0].mxu0 %v283
  %v1500 = vpop.f32.mrb[0].mxu0
  %v1501 = vadd.f32 %v1458, %v1500
  %v1502 = vpop.f32.mrb[0].mxu0
  %v1503 = vadd.f32 %v1460, %v1502
  %v1504 = vpop.f32.mrb[0].mxu0
  %v1505 = vadd.f32 %v1462, %v1504
  %v1506 = vpop.f32.mrb[0].mxu0
  %v1507 = vadd.f32 %v1464, %v1506
  %1508 = vdwg.mxu0
  %vm1509 = vcmp.ge.f32.partialorder %v1372, 0.0
  %vm1510 = vcmp.ge.f32.partialorder %v1374, 0.0
  %vm1511 = vcmp.ge.f32.partialorder %v1501, 0.0
  %vm1512 = vcmp.ge.f32.partialorder %v1503, 0.0
  %vm1513 = vcmp.ge.f32.partialorder %v1376, 0.0
  %vm1514 = vcmp.ge.f32.partialorder %v1378, 0.0
  %vm1515 = vcmp.ge.f32.partialorder %v1505, 0.0
  %vm1516 = vcmp.ge.f32.partialorder %v1507, 0.0
  %v1517 = vmul.f32 %v1372, 0.01
  %v1518 = vmul.f32 %v1374, 0.01
  %v1519 = vmul.f32 %v1501, 0.01
  %v1520 = vmul.f32 %v1503, 0.01
  %v1521 = vmul.f32 %v1376, 0.01
  %v1522 = vmul.f32 %v1378, 0.01
  %v1523 = vmul.f32 %v1505, 0.01
  %v1524 = vmul.f32 %v1507, 0.01
  %v1525 = vsel %vm1509, %v1372, %v1517
  %v1526 = vsel %vm1510, %v1374, %v1518
  %v1527 = vsel %vm1511, %v1501, %v1519
  %v1528 = vsel %vm1512, %v1503, %v1520
  %v1529 = vsel %vm1513, %v1376, %v1521
  %v1530 = vsel %vm1514, %v1378, %v1522
  %v1531 = vsel %vm1515, %v1505, %v1523
  %v1532 = vsel %vm1516, %v1507, %v1524
  %1533 = vst [vmem:[%s10] sm:$0xff] %v1525
  %1534 = vst [vmem:[%s10 + $0x8] sm:$0xff] %v1526
  %1535 = vst [vmem:[%s10 + $0x10] sm:$0xff] %v1527
  %1536 = vst [vmem:[%s10 + $0x18] sm:$0xff] %v1528
  %1537 = vst [vmem:[%s10 + $0x20] sm:$0xff] %v1529
  %1538 = vst [vmem:[%s10 + $0x28] sm:$0xff] %v1530
  %1539 = vst [vmem:[%s10 + $0x30] sm:$0xff] %v1531
  %1540 = vst [vmem:[%s10 + $0x38] sm:$0xff] %v1532
  %v1541 = vpack.c.bf16 %v1529, %v1525
  %v1542 = vpack.c.bf16 %v1530, %v1526
  %v1543 = vpack.c.bf16 %v1531, %v1527
  %v1544 = vpack.c.bf16 %v1532, %v1528
  %v1545 = vld [vmem:[%s2] sm:$0xff]
  %v1546 = vld [vmem:[%s2 + $0x8] sm:$0xff]
  %v1547 = vld [vmem:[%s2 + $0x10] sm:$0xff]
  %v1548 = vld [vmem:[%s2 + $0x18] sm:$0xff]
  %v1549 = vld [vmem:[%s2 + $0x20] sm:$0xff]
  %v1550 = vld [vmem:[%s2 + $0x28] sm:$0xff]
  %v1551 = vld [vmem:[%s2 + $0x30] sm:$0xff]
  %v1552 = vld [vmem:[%s2 + $0x38] sm:$0xff]
  %v1553 = vld [vmem:[%s2 + $0x40] sm:$0xff]
  %v1554 = vld [vmem:[%s2 + $0x48] sm:$0xff]
  %v1555 = vld [vmem:[%s2 + $0x50] sm:$0xff]
  %v1556 = vld [vmem:[%s2 + $0x58] sm:$0xff]
  %v1557 = vld [vmem:[%s2 + $0x60] sm:$0xff]
  %v1558 = vld [vmem:[%s2 + $0x68] sm:$0xff]
  %v1559 = vld [vmem:[%s2 + $0x70] sm:$0xff]
  %v1560 = vld [vmem:[%s2 + $0x78] sm:$0xff]
  %v1561 = vld [vmem:[%s2 + $0x80] sm:$0xff]
  %v1562 = vld [vmem:[%s2 + $0x88] sm:$0xff]
  %v1563 = vld [vmem:[%s2 + $0x90] sm:$0xff]
  %v1564 = vld [vmem:[%s2 + $0x98] sm:$0xff]
  %v1565 = vld [vmem:[%s2 + $0xa0] sm:$0xff]
  %v1566 = vld [vmem:[%s2 + $0xa8] sm:$0xff]
  %v1567 = vld [vmem:[%s2 + $0xb0] sm:$0xff]
  %v1568 = vld [vmem:[%s2 + $0xb8] sm:$0xff]
  %v1569 = vld [vmem:[%s2 + $0xc0] sm:$0xff]
  %v1570 = vld [vmem:[%s2 + $0xc8] sm:$0xff]
  %v1571 = vld [vmem:[%s2 + $0xd0] sm:$0xff]
  %v1572 = vld [vmem:[%s2 + $0xd8] sm:$0xff]
  %v1573 = vld [vmem:[%s2 + $0xe0] sm:$0xff]
  %v1574 = vld [vmem:[%s2 + $0xe8] sm:$0xff]
  %v1575 = vld [vmem:[%s2 + $0xf0] sm:$0xff]
  %v1576 = vld [vmem:[%s2 + $0xf8] sm:$0xff]
  %v1577 = vld [vmem:[%s2 + $0x100] sm:$0xff]
  %v1578 = vld [vmem:[%s2 + $0x108] sm:$0xff]
  %v1579 = vld [vmem:[%s2 + $0x110] sm:$0xff]
  %v1580 = vld [vmem:[%s2 + $0x118] sm:$0xff]
  %v1581 = vld [vmem:[%s2 + $0x120] sm:$0xff]
  %v1582 = vld [vmem:[%s2 + $0x128] sm:$0xff]
  %v1583 = vld [vmem:[%s2 + $0x130] sm:$0xff]
  %v1584 = vld [vmem:[%s2 + $0x138] sm:$0xff]
  %v1585 = vld [vmem:[%s2 + $0x140] sm:$0xff]
  %v1586 = vld [vmem:[%s2 + $0x148] sm:$0xff]
  %v1587 = vld [vmem:[%s2 + $0x150] sm:$0xff]
  %v1588 = vld [vmem:[%s2 + $0x158] sm:$0xff]
  %v1589 = vld [vmem:[%s2 + $0x160] sm:$0xff]
  %v1590 = vld [vmem:[%s2 + $0x168] sm:$0xff]
  %v1591 = vld [vmem:[%s2 + $0x170] sm:$0xff]
  %v1592 = vld [vmem:[%s2 + $0x178] sm:$0xff]
  %v1593 = vld [vmem:[%s2 + $0x180] sm:$0xff]
  %v1594 = vld [vmem:[%s2 + $0x188] sm:$0xff]
  %v1595 = vld [vmem:[%s2 + $0x190] sm:$0xff]
  %v1596 = vld [vmem:[%s2 + $0x198] sm:$0xff]
  %v1597 = vld [vmem:[%s2 + $0x1a0] sm:$0xff]
  %v1598 = vld [vmem:[%s2 + $0x1a8] sm:$0xff]
  %v1599 = vld [vmem:[%s2 + $0x1b0] sm:$0xff]
  %v1600 = vld [vmem:[%s2 + $0x1b8] sm:$0xff]
  %v1601 = vld [vmem:[%s2 + $0x1c0] sm:$0xff]
  %v1602 = vld [vmem:[%s2 + $0x1c8] sm:$0xff]
  %v1603 = vld [vmem:[%s2 + $0x1d0] sm:$0xff]
  %v1604 = vld [vmem:[%s2 + $0x1d8] sm:$0xff]
  %v1605 = vld [vmem:[%s2 + $0x1e0] sm:$0xff]
  %v1606 = vld [vmem:[%s2 + $0x1e8] sm:$0xff]
  %v1607 = vld [vmem:[%s2 + $0x1f0] sm:$0xff]
  %v1608 = vld [vmem:[%s2 + $0x1f8] sm:$0xff]
  %v1609 = vld [vmem:[%s6] sm:$0x3]
  %v1611 = vlaneseq
  %v1612 = vshrl.u32 %v1611, 7
  %v1613 = vsub.s32 0, %v1612
  %v1614 = vrot.slane %v1609, %v1613
  %v1615 = vlaneseq
  %v1616 = vshrl.u32 %v1615, 7
  %v1617 = vsub.s32 1, %v1616
  %v1618 = vrot.slane %v1609, %v1617
  %v1685 = vunpack.c.l.b16 %v1545
  %v1686 = vunpack.c.h.b16 %v1545
  %v1687 = vunpack.c.l.b16 %v1546
  %v1688 = vunpack.c.h.b16 %v1546
  %v1689 = vunpack.c.l.b16 %v1547
  %v1690 = vunpack.c.h.b16 %v1547
  %v1691 = vunpack.c.l.b16 %v1548
  %v1692 = vunpack.c.h.b16 %v1548
  %v1693 = vunpack.c.l.b16 %v1549
  %v1694 = vunpack.c.h.b16 %v1549
  %v1695 = vunpack.c.l.b16 %v1550
  %v1696 = vunpack.c.h.b16 %v1550
  %v1697 = vunpack.c.l.b16 %v1551
  %v1698 = vunpack.c.h.b16 %v1551
  %v1699 = vunpack.c.l.b16 %v1552
  %v1700 = vunpack.c.h.b16 %v1552
  %v1701 = vunpack.c.l.b16 %v1553
  %v1702 = vunpack.c.h.b16 %v1553
  %v1703 = vunpack.c.l.b16 %v1554
  %v1704 = vunpack.c.h.b16 %v1554
  %v1705 = vunpack.c.l.b16 %v1555
  %v1706 = vunpack.c.h.b16 %v1555
  %v1707 = vunpack.c.l.b16 %v1556
  %v1708 = vunpack.c.h.b16 %v1556
  %v1709 = vunpack.c.l.b16 %v1557
  %v1710 = vunpack.c.h.b16 %v1557
  %v1711 = vunpack.c.l.b16 %v1558
  %v1712 = vunpack.c.h.b16 %v1558
  %v1713 = vunpack.c.l.b16 %v1559
  %v1714 = vunpack.c.h.b16 %v1559
  %v1715 = vunpack.c.l.b16 %v1560
  %v1716 = vunpack.c.h.b16 %v1560
  %v1717 = vunpack.c.l.b16 %v1561
  %v1718 = vunpack.c.h.b16 %v1561
  %v1719 = vunpack.c.l.b16 %v1562
  %v1720 = vunpack.c.h.b16 %v1562
  %v1721 = vunpack.c.l.b16 %v1563
  %v1722 = vunpack.c.h.b16 %v1563
  %v1723 = vunpack.c.l.b16 %v1564
  %v1724 = vunpack.c.h.b16 %v1564
  %v1725 = vunpack.c.l.b16 %v1565
  %v1726 = vunpack.c.h.b16 %v1565
  %v1727 = vunpack.c.l.b16 %v1566
  %v1728 = vunpack.c.h.b16 %v1566
  %v1729 = vunpack.c.l.b16 %v1567
  %v1730 = vunpack.c.h.b16 %v1567
  %v1731 = vunpack.c.l.b16 %v1568
  %v1732 = vunpack.c.h.b16 %v1568
  %v1733 = vunpack.c.l.b16 %v1569
  %v1734 = vunpack.c.h.b16 %v1569
  %v1735 = vunpack.c.l.b16 %v1570
  %v1736 = vunpack.c.h.b16 %v1570
  %v1737 = vunpack.c.l.b16 %v1571
  %v1738 = vunpack.c.h.b16 %v1571
  %v1739 = vunpack.c.l.b16 %v1572
  %v1740 = vunpack.c.h.b16 %v1572
  %v1741 = vunpack.c.l.b16 %v1573
  %v1742 = vunpack.c.h.b16 %v1573
  %v1743 = vunpack.c.l.b16 %v1574
  %v1744 = vunpack.c.h.b16 %v1574
  %v1745 = vunpack.c.l.b16 %v1575
  %v1746 = vunpack.c.h.b16 %v1575
  %v1747 = vunpack.c.l.b16 %v1576
  %v1748 = vunpack.c.h.b16 %v1576
  %v1749 = vunpack.c.l.b16 %v1577
  %v1750 = vunpack.c.h.b16 %v1577
  %v1751 = vunpack.c.l.b16 %v1578
  %v1752 = vunpack.c.h.b16 %v1578
  %v1753 = vunpack.c.l.b16 %v1579
  %v1754 = vunpack.c.h.b16 %v1579
  %v1755 = vunpack.c.l.b16 %v1580
  %v1756 = vunpack.c.h.b16 %v1580
  %v1757 = vunpack.c.l.b16 %v1581
  %v1758 = vunpack.c.h.b16 %v1581
  %v1759 = vunpack.c.l.b16 %v1582
  %v1760 = vunpack.c.h.b16 %v1582
  %v1761 = vunpack.c.l.b16 %v1583
  %v1762 = vunpack.c.h.b16 %v1583
  %v1763 = vunpack.c.l.b16 %v1584
  %v1764 = vunpack.c.h.b16 %v1584
  %v1765 = vunpack.c.l.b16 %v1585
  %v1766 = vunpack.c.h.b16 %v1585
  %v1767 = vunpack.c.l.b16 %v1586
  %v1768 = vunpack.c.h.b16 %v1586
  %v1769 = vunpack.c.l.b16 %v1587
  %v1770 = vunpack.c.h.b16 %v1587
  %v1771 = vunpack.c.l.b16 %v1588
  %v1772 = vunpack.c.h.b16 %v1588
  %v1773 = vunpack.c.l.b16 %v1589
  %v1774 = vunpack.c.h.b16 %v1589
  %v1775 = vunpack.c.l.b16 %v1590
  %v1776 = vunpack.c.h.b16 %v1590
  %v1777 = vunpack.c.l.b16 %v1591
  %v1778 = vunpack.c.h.b16 %v1591
  %v1779 = vunpack.c.l.b16 %v1592
  %v1780 = vunpack.c.h.b16 %v1592
  %v1781 = vunpack.c.l.b16 %v1593
  %v1782 = vunpack.c.h.b16 %v1593
  %v1783 = vunpack.c.l.b16 %v1594
  %v1784 = vunpack.c.h.b16 %v1594
  %v1785 = vunpack.c.l.b16 %v1595
  %v1786 = vunpack.c.h.b16 %v1595
  %v1787 = vunpack.c.l.b16 %v1596
  %v1788 = vunpack.c.h.b16 %v1596
  %v1789 = vunpack.c.l.b16 %v1597
  %v1790 = vunpack.c.h.b16 %v1597
  %v1791 = vunpack.c.l.b16 %v1598
  %v1792 = vunpack.c.h.b16 %v1598
  %v1793 = vunpack.c.l.b16 %v1599
  %v1794 = vunpack.c.h.b16 %v1599
  %v1795 = vunpack.c.l.b16 %v1600
  %v1796 = vunpack.c.h.b16 %v1600
  %v1797 = vunpack.c.l.b16 %v1601
  %v1798 = vunpack.c.h.b16 %v1601
  %v1799 = vunpack.c.l.b16 %v1602
  %v1800 = vunpack.c.h.b16 %v1602
  %v1801 = vunpack.c.l.b16 %v1603
  %v1802 = vunpack.c.h.b16 %v1603
  %v1803 = vunpack.c.l.b16 %v1604
  %v1804 = vunpack.c.h.b16 %v1604
  %v1805 = vunpack.c.l.b16 %v1605
  %v1806 = vunpack.c.h.b16 %v1605
  %v1807 = vunpack.c.l.b16 %v1606
  %v1808 = vunpack.c.h.b16 %v1606
  %v1809 = vunpack.c.l.b16 %v1607
  %v1810 = vunpack.c.h.b16 %v1607
  %v1811 = vunpack.c.l.b16 %v1608
  %v1812 = vunpack.c.h.b16 %v1608
  %v1813 = vpack.c.b16 %v1687, %v1685
  %v1814 = vpack.c.b16 %v1688, %v1686
  %v1815 = vpack.c.b16 %v1691, %v1689
  %v1816 = vpack.c.b16 %v1692, %v1690
  %v1817 = vpack.c.b16 %v1695, %v1693
  %v1818 = vpack.c.b16 %v1696, %v1694
  %v1819 = vpack.c.b16 %v1699, %v1697
  %v1820 = vpack.c.b16 %v1700, %v1698
  %v1821 = vpack.c.b16 %v1703, %v1701
  %v1822 = vpack.c.b16 %v1704, %v1702
  %v1823 = vpack.c.b16 %v1707, %v1705
  %v1824 = vpack.c.b16 %v1708, %v1706
  %v1825 = vpack.c.b16 %v1711, %v1709
  %v1826 = vpack.c.b16 %v1712, %v1710
  %v1827 = vpack.c.b16 %v1715, %v1713
  %v1828 = vpack.c.b16 %v1716, %v1714
  %v1829 = vpack.c.b16 %v1719, %v1717
  %v1830 = vpack.c.b16 %v1720, %v1718
  %v1831 = vpack.c.b16 %v1723, %v1721
  %v1832 = vpack.c.b16 %v1724, %v1722
  %v1833 = vpack.c.b16 %v1727, %v1725
  %v1834 = vpack.c.b16 %v1728, %v1726
  %v1835 = vpack.c.b16 %v1731, %v1729
  %v1836 = vpack.c.b16 %v1732, %v1730
  %v1837 = vpack.c.b16 %v1735, %v1733
  %v1838 = vpack.c.b16 %v1736, %v1734
  %v1839 = vpack.c.b16 %v1739, %v1737
  %v1840 = vpack.c.b16 %v1740, %v1738
  %v1841 = vpack.c.b16 %v1743, %v1741
  %v1842 = vpack.c.b16 %v1744, %v1742
  %v1843 = vpack.c.b16 %v1747, %v1745
  %v1844 = vpack.c.b16 %v1748, %v1746
  %v1845 = vpack.c.b16 %v1751, %v1749
  %v1846 = vpack.c.b16 %v1752, %v1750
  %v1847 = vpack.c.b16 %v1755, %v1753
  %v1848 = vpack.c.b16 %v1756, %v1754
  %v1849 = vpack.c.b16 %v1759, %v1757
  %v1850 = vpack.c.b16 %v1760, %v1758
  %v1851 = vpack.c.b16 %v1763, %v1761
  %v1852 = vpack.c.b16 %v1764, %v1762
  %v1853 = vpack.c.b16 %v1767, %v1765
  %v1854 = vpack.c.b16 %v1768, %v1766
  %v1855 = vpack.c.b16 %v1771, %v1769
  %v1856 = vpack.c.b16 %v1772, %v1770
  %v1857 = vpack.c.b16 %v1775, %v1773
  %v1858 = vpack.c.b16 %v1776, %v1774
  %v1859 = vpack.c.b16 %v1779, %v1777
  %v1860 = vpack.c.b16 %v1780, %v1778
  %v1861 = vpack.c.b16 %v1783, %v1781
  %v1862 = vpack.c.b16 %v1784, %v1782
  %v1863 = vpack.c.b16 %v1787, %v1785
  %v1864 = vpack.c.b16 %v1788, %v1786
  %v1865 = vpack.c.b16 %v1791, %v1789
  %v1866 = vpack.c.b16 %v1792, %v1790
  %v1867 = vpack.c.b16 %v1795, %v1793
  %v1868 = vpack.c.b16 %v1796, %v1794
  %v1869 = vpack.c.b16 %v1799, %v1797
  %v1870 = vpack.c.b16 %v1800, %v1798
  %v1871 = vpack.c.b16 %v1803, %v1801
  %v1872 = vpack.c.b16 %v1804, %v1802
  %v1873 = vpack.c.b16 %v1807, %v1805
  %v1874 = vpack.c.b16 %v1808, %v1806
  %v1875 = vpack.c.b16 %v1811, %v1809
  %v1876 = vpack.c.b16 %v1812, %v1810
  %1941 = vmatprep.subr.bf16.mxu0 %v1814
  %1942 = vmatpush1.bf16.msra.mxu0 %v1813
  %1943 = vmatprep.subr.bf16.mxu0 %v1816
  %1944 = vmatpush1.bf16.msra.mxu0 %v1815
  %1945 = vmatprep.subr.bf16.mxu0 %v1818
  %1946 = vmatpush1.bf16.msra.mxu0 %v1817
  %1947 = vmatprep.subr.bf16.mxu0 %v1820
  %1948 = vmatpush1.bf16.msra.mxu0 %v1819
  %1949 = vmatprep.subr.bf16.mxu0 %v1822
  %1950 = vmatpush1.bf16.msra.mxu0 %v1821
  %1951 = vmatprep.subr.bf16.mxu0 %v1824
  %1952 = vmatpush1.bf16.msra.mxu0 %v1823
  %1953 = vmatprep.subr.bf16.mxu0 %v1826
  %1954 = vmatpush1.bf16.msra.mxu0 %v1825
  %1955 = vmatprep.subr.bf16.mxu0 %v1828
  %1956 = vmatpush1.bf16.msra.mxu0 %v1827
  %1957 = vmatprep.subr.bf16.mxu0 %v1830
  %1958 = vmatpush1.bf16.msra.mxu0 %v1829
  %1959 = vmatprep.subr.bf16.mxu0 %v1832
  %1960 = vmatpush1.bf16.msra.mxu0 %v1831
  %1961 = vmatprep.subr.bf16.mxu0 %v1834
  %1962 = vmatpush1.bf16.msra.mxu0 %v1833
  %1963 = vmatprep.subr.bf16.mxu0 %v1836
  %1964 = vmatpush1.bf16.msra.mxu0 %v1835
  %1965 = vmatprep.subr.bf16.mxu0 %v1838
  %1966 = vmatpush1.bf16.msra.mxu0 %v1837
  %1967 = vmatprep.subr.bf16.mxu0 %v1840
  %1968 = vmatpush1.bf16.msra.mxu0 %v1839
  %1969 = vmatprep.subr.bf16.mxu0 %v1842
  %1970 = vmatpush1.bf16.msra.mxu0 %v1841
  %1971 = vmatprep.subr.bf16.mxu0 %v1844
  %1972 = vmatpush1.bf16.msra.mxu0 %v1843
  %1973 = vmatprep.mubr.bf16.mxu0 %v1542
  %1974 = vmatmul.mubr.bf16.gmra.mrb[0].mxu0 %v1541
  %v1975 = vpop.f32.mrb[0].mxu0
  %v1976 = vadd.f32 %v1614, %v1975
  %v1977 = vpop.f32.mrb[0].mxu0
  %v1978 = vadd.f32 %v1618, %v1977
  %v1979 = vpop.f32.mrb[0].mxu0
  %v1980 = vadd.f32 %v1614, %v1979
  %v1981 = vpop.f32.mrb[0].mxu0
  %v1982 = vadd.f32 %v1618, %v1981
  %1983 = vdwg.mxu0
  %1984 = vmatprep.subr.bf16.mxu0 %v1846
  %1985 = vmatpush1.bf16.msra.mxu0 %v1845
  %1986 = vmatprep.subr.bf16.mxu0 %v1848
  %1987 = vmatpush1.bf16.msra.mxu0 %v1847
  %1988 = vmatprep.subr.bf16.mxu0 %v1850
  %1989 = vmatpush1.bf16.msra.mxu0 %v1849
  %1990 = vmatprep.subr.bf16.mxu0 %v1852
  %1991 = vmatpush1.bf16.msra.mxu0 %v1851
  %1992 = vmatprep.subr.bf16.mxu0 %v1854
  %1993 = vmatpush1.bf16.msra.mxu0 %v1853
  %1994 = vmatprep.subr.bf16.mxu0 %v1856
  %1995 = vmatpush1.bf16.msra.mxu0 %v1855
  %1996 = vmatprep.subr.bf16.mxu0 %v1858
  %1997 = vmatpush1.bf16.msra.mxu0 %v1857
  %1998 = vmatprep.subr.bf16.mxu0 %v1860
  %1999 = vmatpush1.bf16.msra.mxu0 %v1859
  %2000 = vmatprep.subr.bf16.mxu0 %v1862
  %2001 = vmatpush1.bf16.msra.mxu0 %v1861
  %2002 = vmatprep.subr.bf16.mxu0 %v1864
  %2003 = vmatpush1.bf16.msra.mxu0 %v1863
  %2004 = vmatprep.subr.bf16.mxu0 %v1866
  %2005 = vmatpush1.bf16.msra.mxu0 %v1865
  %2006 = vmatprep.subr.bf16.mxu0 %v1868
  %2007 = vmatpush1.bf16.msra.mxu0 %v1867
  %2008 = vmatprep.subr.bf16.mxu0 %v1870
  %2009 = vmatpush1.bf16.msra.mxu0 %v1869
  %2010 = vmatprep.subr.bf16.mxu0 %v1872
  %2011 = vmatpush1.bf16.msra.mxu0 %v1871
  %2012 = vmatprep.subr.bf16.mxu0 %v1874
  %2013 = vmatpush1.bf16.msra.mxu0 %v1873
  %2014 = vmatprep.subr.bf16.mxu0 %v1876
  %2015 = vmatpush1.bf16.msra.mxu0 %v1875
  %2016 = vmatprep.mubr.bf16.mxu0 %v1544
  %2017 = vmatmul.mubr.bf16.gmra.mrb[0].mxu0 %v1543
  %v2018 = vpop.f32.mrb[0].mxu0
  %v2019 = vadd.f32 %v1976, %v2018
  %v2020 = vpop.f32.mrb[0].mxu0
  %v2021 = vadd.f32 %v1978, %v2020
  %v2022 = vpop.f32.mrb[0].mxu0
  %v2023 = vadd.f32 %v1980, %v2022
  %v2024 = vpop.f32.mrb[0].mxu0
  %v2025 = vadd.f32 %v1982, %v2024
  %2026 = vdwg.mxu0
  %vm2027 = vcmp.ge.f32.partialorder %v2019, 0.0
  %vm2028 = vcmp.ge.f32.partialorder %v2021, 0.0
  %vm2029 = vcmp.ge.f32.partialorder %v2023, 0.0
  %vm2030 = vcmp.ge.f32.partialorder %v2025, 0.0
  %v2031 = vmul.f32 %v2019, 0.01
  %v2032 = vmul.f32 %v2021, 0.01
  %v2033 = vmul.f32 %v2023, 0.01
  %v2034 = vmul.f32 %v2025, 0.01
  %v2035 = vsel %vm2027, %v2019, %v2031
  %v2036 = vsel %vm2028, %v2021, %v2032
  %v2037 = vsel %vm2029, %v2023, %v2033
  %v2038 = vsel %vm2030, %v2025, %v2034
  %2039 = vst [vmem:[%s11] sm:$0xff] %v2035
  %2040 = vst [vmem:[%s11 + $0x8] sm:$0xff] %v2036
  %2041 = vst [vmem:[%s11 + $0x10] sm:$0xff] %v2037
  %2042 = vst [vmem:[%s11 + $0x18] sm:$0xff] %v2038
  %v2043 = vpack.c.bf16 %v2037, %v2035
  %v2044 = vpack.c.bf16 %v2038, %v2036
  %v2045 = vld [vmem:[%s3] sm:$0xf]
  %v2046 = vld [vmem:[%s3 + $0x4] sm:$0xf]
  %v2047 = vld [vmem:[%s3 + $0x8] sm:$0xf]
  %v2048 = vld [vmem:[%s3 + $0xc] sm:$0xf]
  %v2049 = vld [vmem:[%s3 + $0x10] sm:$0xf]
  %v2050 = vld [vmem:[%s3 + $0x14] sm:$0xf]
  %v2051 = vld [vmem:[%s3 + $0x18] sm:$0xf]
  %v2052 = vld [vmem:[%s3 + $0x1c] sm:$0xf]
  %v2053 = vld [vmem:[%s3 + $0x20] sm:$0xf]
  %v2054 = vld [vmem:[%s3 + $0x24] sm:$0xf]
  %v2055 = vld [vmem:[%s3 + $0x28] sm:$0xf]
  %v2056 = vld [vmem:[%s3 + $0x2c] sm:$0xf]
  %v2057 = vld [vmem:[%s3 + $0x30] sm:$0xf]
  %v2058 = vld [vmem:[%s3 + $0x34] sm:$0xf]
  %v2059 = vld [vmem:[%s3 + $0x38] sm:$0xf]
  %v2060 = vld [vmem:[%s3 + $0x3c] sm:$0xf]
  %v2061 = vld [vmem:[%s3 + $0x40] sm:$0xf]
  %v2062 = vld [vmem:[%s3 + $0x44] sm:$0xf]
  %v2063 = vld [vmem:[%s3 + $0x48] sm:$0xf]
  %v2064 = vld [vmem:[%s3 + $0x4c] sm:$0xf]
  %v2065 = vld [vmem:[%s3 + $0x50] sm:$0xf]
  %v2066 = vld [vmem:[%s3 + $0x54] sm:$0xf]
  %v2067 = vld [vmem:[%s3 + $0x58] sm:$0xf]
  %v2068 = vld [vmem:[%s3 + $0x5c] sm:$0xf]
  %v2069 = vld [vmem:[%s3 + $0x60] sm:$0xf]
  %v2070 = vld [vmem:[%s3 + $0x64] sm:$0xf]
  %v2071 = vld [vmem:[%s3 + $0x68] sm:$0xf]
  %v2072 = vld [vmem:[%s3 + $0x6c] sm:$0xf]
  %v2073 = vld [vmem:[%s3 + $0x70] sm:$0xf]
  %v2074 = vld [vmem:[%s3 + $0x74] sm:$0xf]
  %v2075 = vld [vmem:[%s3 + $0x78] sm:$0xf]
  %v2076 = vld [vmem:[%s3 + $0x7c] sm:$0xf]
  %v2077 = vld [vmem:[%s7] sm:$0x1]
  %v2079 = vlaneseq
  %v2080 = vshrl.u32 %v2079, 7
  %v2081 = vsub.s32 0, %v2080
  %v2082 = vrot.slane %v2077, %v2081
  %v2116 = vunpack.c.l.b16 %v2045
  %v2117 = vunpack.c.l.b16 %v2046
  %v2118 = vunpack.c.l.b16 %v2047
  %v2119 = vunpack.c.l.b16 %v2048
  %v2120 = vunpack.c.l.b16 %v2049
  %v2121 = vunpack.c.l.b16 %v2050
  %v2122 = vunpack.c.l.b16 %v2051
  %v2123 = vunpack.c.l.b16 %v2052
  %v2124 = vunpack.c.l.b16 %v2053
  %v2125 = vunpack.c.l.b16 %v2054
  %v2126 = vunpack.c.l.b16 %v2055
  %v2127 = vunpack.c.l.b16 %v2056
  %v2128 = vunpack.c.l.b16 %v2057
  %v2129 = vunpack.c.l.b16 %v2058
  %v2130 = vunpack.c.l.b16 %v2059
  %v2131 = vunpack.c.l.b16 %v2060
  %v2132 = vunpack.c.l.b16 %v2061
  %v2133 = vunpack.c.l.b16 %v2062
  %v2134 = vunpack.c.l.b16 %v2063
  %v2135 = vunpack.c.l.b16 %v2064
  %v2136 = vunpack.c.l.b16 %v2065
  %v2137 = vunpack.c.l.b16 %v2066
  %v2138 = vunpack.c.l.b16 %v2067
  %v2139 = vunpack.c.l.b16 %v2068
  %v2140 = vunpack.c.l.b16 %v2069
  %v2141 = vunpack.c.l.b16 %v2070
  %v2142 = vunpack.c.l.b16 %v2071
  %v2143 = vunpack.c.l.b16 %v2072
  %v2144 = vunpack.c.l.b16 %v2073
  %v2145 = vunpack.c.l.b16 %v2074
  %v2146 = vunpack.c.l.b16 %v2075
  %v2147 = vunpack.c.l.b16 %v2076
  %v2148 = vpack.c.b16 %v2117, %v2116
  %v2149 = vpack.c.b16 %v2119, %v2118
  %v2150 = vpack.c.b16 %v2121, %v2120
  %v2151 = vpack.c.b16 %v2123, %v2122
  %v2152 = vpack.c.b16 %v2125, %v2124
  %v2153 = vpack.c.b16 %v2127, %v2126
  %v2154 = vpack.c.b16 %v2129, %v2128
  %v2155 = vpack.c.b16 %v2131, %v2130
  %v2156 = vpack.c.b16 %v2133, %v2132
  %v2157 = vpack.c.b16 %v2135, %v2134
  %v2158 = vpack.c.b16 %v2137, %v2136
  %v2159 = vpack.c.b16 %v2139, %v2138
  %v2160 = vpack.c.b16 %v2141, %v2140
  %v2161 = vpack.c.b16 %v2143, %v2142
  %v2162 = vpack.c.b16 %v2145, %v2144
  %v2163 = vpack.c.b16 %v2147, %v2146
  %2180 = vmatprep.subr.bf16.mxu0 0
  %2181 = vmatpush1.bf16.msra.mxu0 %v2148
  %2182 = vmatprep.subr.bf16.mxu0 0
  %2183 = vmatpush1.bf16.msra.mxu0 %v2149
  %2184 = vmatprep.subr.bf16.mxu0 0
  %2185 = vmatpush1.bf16.msra.mxu0 %v2150
  %2186 = vmatprep.subr.bf16.mxu0 0
  %2187 = vmatpush1.bf16.msra.mxu0 %v2151
  %2188 = vmatprep.subr.bf16.mxu0 0
  %2189 = vmatpush1.bf16.msra.mxu0 %v2152
  %2190 = vmatprep.subr.bf16.mxu0 0
  %2191 = vmatpush1.bf16.msra.mxu0 %v2153
  %2192 = vmatprep.subr.bf16.mxu0 0
  %2193 = vmatpush1.bf16.msra.mxu0 %v2154
  %2194 = vmatprep.subr.bf16.mxu0 0
  %2195 = vmatpush1.bf16.msra.mxu0 %v2155
  %2196 = vmatprep.subr.bf16.mxu0 0
  %2197 = vmatpush1.bf16.msra.mxu0 %v2156
  %2198 = vmatprep.subr.bf16.mxu0 0
  %2199 = vmatpush1.bf16.msra.mxu0 %v2157
  %2200 = vmatprep.subr.bf16.mxu0 0
  %2201 = vmatpush1.bf16.msra.mxu0 %v2158
  %2202 = vmatprep.subr.bf16.mxu0 0
  %2203 = vmatpush1.bf16.msra.mxu0 %v2159
  %2204 = vmatprep.subr.bf16.mxu0 0
  %2205 = vmatpush1.bf16.msra.mxu0 %v2160
  %2206 = vmatprep.subr.bf16.mxu0 0
  %2207 = vmatpush1.bf16.msra.mxu0 %v2161
  %2208 = vmatprep.subr.bf16.mxu0 0
  %2209 = vmatpush1.bf16.msra.mxu0 %v2162
  %2210 = vmatprep.subr.bf16.mxu0 0
  %2211 = vmatpush1.bf16.msra.mxu0 %v2163
  %2212 = vmatprep.mubr.bf16.mxu0 %v2044
  %2213 = vmatmul.mubr.bf16.gmra.mrb[0].mxu0 %v2043
  %v2214 = vpop.f32.mrb[0].mxu0
  %v2215 = vadd.f32 %v2082, %v2214
  %v2216 = vpop.f32.mrb[0].mxu0
  %v2217 = vpop.f32.mrb[0].mxu0
  %v2218 = vadd.f32 %v2082, %v2217
  %v2219 = vpop.f32.mrb[0].mxu0
  %2220 = vdwg.mxu0
  %vm2221 = vcmp.ge.f32.partialorder %v2215, 0.0
  %vm2222 = vcmp.ge.f32.partialorder %v2218, 0.0
  %v2223 = vmul.f32 %v2215, 0.01
  %v2224 = vmul.f32 %v2218, 0.01
  %v2225 = vsel %vm2221, %v2215, %v2223
  %v2226 = vsel %vm2222, %v2218, %v2224
  %2227 = vst [vmem:[%s12] sm:$0xff] %v2225
  %2228 = vst [vmem:[%s12 + $0x8] sm:$0xff] %v2226
  %v2229 = vpack.c.bf16 %v2226, %v2225
  %v2230 = vld [vmem:[%s4] sm:$0xf]
  %v2231 = vld [vmem:[%s4 + $0x4] sm:$0xf]
  %v2232 = vld [vmem:[%s4 + $0x8] sm:$0xf]
  %v2233 = vld [vmem:[%s4 + $0xc] sm:$0xf]
  %v2234 = vld [vmem:[%s4 + $0x10] sm:$0xf]
  %v2235 = vld [vmem:[%s4 + $0x14] sm:$0xf]
  %v2236 = vld [vmem:[%s4 + $0x18] sm:$0xf]
  %v2237 = vld [vmem:[%s4 + $0x1c] sm:$0xf]
  %v2238 = vld [vmem:[%s4 + $0x20] sm:$0xf]
  %v2239 = vld [vmem:[%s4 + $0x24] sm:$0xf]
  %v2240 = vld [vmem:[%s4 + $0x28] sm:$0xf]
  %v2241 = vld [vmem:[%s4 + $0x2c] sm:$0xf]
  %v2242 = vld [vmem:[%s4 + $0x30] sm:$0xf]
  %v2243 = vld [vmem:[%s4 + $0x34] sm:$0xf]
  %v2244 = vld [vmem:[%s4 + $0x38] sm:$0xf]
  %v2245 = vld [vmem:[%s4 + $0x3c] sm:$0xf]
  %v2246 = vld [vmem:[%s8] sm:$0x1]
  %v2248 = vlaneseq
  %v2249 = vshrl.u32 %v2248, 7
  %v2250 = vsub.s32 0, %v2249
  %v2251 = vrot.slane %v2246, %v2250
  %v2269 = vunpack.c.l.b16 %v2230
  %v2270 = vunpack.c.l.b16 %v2231
  %v2271 = vunpack.c.l.b16 %v2232
  %v2272 = vunpack.c.l.b16 %v2233
  %v2273 = vunpack.c.l.b16 %v2234
  %v2274 = vunpack.c.l.b16 %v2235
  %v2275 = vunpack.c.l.b16 %v2236
  %v2276 = vunpack.c.l.b16 %v2237
  %v2277 = vunpack.c.l.b16 %v2238
  %v2278 = vunpack.c.l.b16 %v2239
  %v2279 = vunpack.c.l.b16 %v2240
  %v2280 = vunpack.c.l.b16 %v2241
  %v2281 = vunpack.c.l.b16 %v2242
  %v2282 = vunpack.c.l.b16 %v2243
  %v2283 = vunpack.c.l.b16 %v2244
  %v2284 = vunpack.c.l.b16 %v2245
  %v2285 = vpack.c.b16 %v2270, %v2269
  %v2286 = vpack.c.b16 %v2272, %v2271
  %v2287 = vpack.c.b16 %v2274, %v2273
  %v2288 = vpack.c.b16 %v2276, %v2275
  %v2289 = vpack.c.b16 %v2278, %v2277
  %v2290 = vpack.c.b16 %v2280, %v2279
  %v2291 = vpack.c.b16 %v2282, %v2281
  %v2292 = vpack.c.b16 %v2284, %v2283
  %2301 = vmatprep.subr.bf16.mxu0 0
  %2302 = vmatpush1.bf16.msra.mxu0 %v2285
  %2303 = vmatprep.subr.bf16.mxu0 0
  %2304 = vmatpush1.bf16.msra.mxu0 %v2286
  %2305 = vmatprep.subr.bf16.mxu0 0
  %2306 = vmatpush1.bf16.msra.mxu0 %v2287
  %2307 = vmatprep.subr.bf16.mxu0 0
  %2308 = vmatpush1.bf16.msra.mxu0 %v2288
  %2309 = vmatprep.subr.bf16.mxu0 0
  %2310 = vmatpush1.bf16.msra.mxu0 %v2289
  %2311 = vmatprep.subr.bf16.mxu0 0
  %2312 = vmatpush1.bf16.msra.mxu0 %v2290
  %2313 = vmatprep.subr.bf16.mxu0 0
  %2314 = vmatpush1.bf16.msra.mxu0 %v2291
  %2315 = vmatprep.subr.bf16.mxu0 0
  %2316 = vmatpush1.bf16.msra.mxu0 %v2292
  %2317 = vmatprep.subr.bf16.mxu0 0
  %2318 = vmatpush1.bf16.msra.mxu0 0
  %2319 = vmatprep.subr.bf16.mxu0 0
  %2320 = vmatpush1.bf16.msra.mxu0 0
  %2321 = vmatprep.subr.bf16.mxu0 0
  %2322 = vmatpush1.bf16.msra.mxu0 0
  %2323 = vmatprep.subr.bf16.mxu0 0
  %2324 = vmatpush1.bf16.msra.mxu0 0
  %2325 = vmatprep.subr.bf16.mxu0 0
  %2326 = vmatpush1.bf16.msra.mxu0 0
  %2327 = vmatprep.subr.bf16.mxu0 0
  %2328 = vmatpush1.bf16.msra.mxu0 0
  %2329 = vmatprep.subr.bf16.mxu0 0
  %2330 = vmatpush1.bf16.msra.mxu0 0
  %2331 = vmatprep.subr.bf16.mxu0 0
  %2332 = vmatpush1.bf16.msra.mxu0 0
  %2333 = vmatprep.mubr.bf16.mxu0 0
  %2334 = vmatmul.mubr.bf16.gmra.mrb[0].mxu0 %v2229
  %v2335 = vpop.f32.mrb[0].mxu0
  %v2336 = vadd.f32 %v2251, %v2335
  %v2337 = vpop.f32.mrb[0].mxu0
  %v2338 = vpop.f32.mrb[0].mxu0
  %v2339 = vadd.f32 %v2251, %v2338
  %v2340 = vpop.f32.mrb[0].mxu0
  %2341 = vdwg.mxu0
  %vm2342 = vcmp.ge.f32.partialorder %v2336, 0.0
  %vm2343 = vcmp.ge.f32.partialorder %v2339, 0.0
  %v2344 = vmul.f32 %v2336, 0.01
  %v2345 = vmul.f32 %v2339, 0.01
  %v2346 = vsel %vm2342, %v2336, %v2344
  %v2347 = vsel %vm2343, %v2339, %v2345
  %2348 = vst [vmem:[%s13] sm:$0xff] %v2346
  %2349 = vst [vmem:[%s13 + $0x8] sm:$0xff] %v2347
  %v2350 = vpack.c.bf16 %v2347, %v2346
  %v2351 = vld [vmem:[%s9] sm:$0xf]
  %v2352 = vld [vmem:[%s9 + $0x4] sm:$0xf]
  %v2353 = vld [vmem:[%s9 + $0x8] sm:$0xf]
  %v2354 = vld [vmem:[%s9 + $0xc] sm:$0xf]
  %v2355 = vld [vmem:[%s9 + $0x10] sm:$0xf]
  %v2356 = vld [vmem:[%s9 + $0x14] sm:$0xf]
  %v2357 = vld [vmem:[%s9 + $0x18] sm:$0xf]
  %v2358 = vld [vmem:[%s9 + $0x1c] sm:$0xf]
  %v2359 = vld [vmem:[%s9 + $0x20] sm:$0xf]
  %v2360 = vld [vmem:[%s9 + $0x24] sm:$0xf]
  %v2361 = vld [vmem:[%s9 + $0x28] sm:$0xf]
  %v2362 = vld [vmem:[%s9 + $0x2c] sm:$0xf]
  %v2363 = vld [vmem:[%s9 + $0x30] sm:$0xf]
  %v2364 = vld [vmem:[%s9 + $0x34] sm:$0xf]
  %v2365 = vld [vmem:[%s9 + $0x38] sm:$0xf]
  %v2366 = vld [vmem:[%s9 + $0x3c] sm:$0xf]
  %v2383 = vunpack.c.l.b16 %v2351
  %v2384 = vunpack.c.l.b16 %v2352
  %v2385 = vunpack.c.l.b16 %v2353
  %v2386 = vunpack.c.l.b16 %v2354
  %v2387 = vunpack.c.l.b16 %v2355
  %v2388 = vunpack.c.l.b16 %v2356
  %v2389 = vunpack.c.l.b16 %v2357
  %v2390 = vunpack.c.l.b16 %v2358
  %v2391 = vunpack.c.l.b16 %v2359
  %v2392 = vunpack.c.l.b16 %v2360
  %v2393 = vunpack.c.l.b16 %v2361
  %v2394 = vunpack.c.l.b16 %v2362
  %v2395 = vunpack.c.l.b16 %v2363
  %v2396 = vunpack.c.l.b16 %v2364
  %v2397 = vunpack.c.l.b16 %v2365
  %v2398 = vunpack.c.l.b16 %v2366
  %v2399 = vpack.c.b16 %v2384, %v2383
  %v2400 = vpack.c.b16 %v2386, %v2385
  %v2401 = vpack.c.b16 %v2388, %v2387
  %v2402 = vpack.c.b16 %v2390, %v2389
  %v2403 = vpack.c.b16 %v2392, %v2391
  %v2404 = vpack.c.b16 %v2394, %v2393
  %v2405 = vpack.c.b16 %v2396, %v2395
  %v2406 = vpack.c.b16 %v2398, %v2397
  %2415 = vmatprep.subr.bf16.mxu0 0
  %2416 = vmatpush1.bf16.msra.mxu0 %v2399
  %2417 = vmatprep.subr.bf16.mxu0 0
  %2418 = vmatpush1.bf16.msra.mxu0 %v2400
  %2419 = vmatprep.subr.bf16.mxu0 0
  %2420 = vmatpush1.bf16.msra.mxu0 %v2401
  %2421 = vmatprep.subr.bf16.mxu0 0
  %2422 = vmatpush1.bf16.msra.mxu0 %v2402
  %2423 = vmatprep.subr.bf16.mxu0 0
  %2424 = vmatpush1.bf16.msra.mxu0 %v2403
  %2425 = vmatprep.subr.bf16.mxu0 0
  %2426 = vmatpush1.bf16.msra.mxu0 %v2404
  %2427 = vmatprep.subr.bf16.mxu0 0
  %2428 = vmatpush1.bf16.msra.mxu0 %v2405
  %2429 = vmatprep.subr.bf16.mxu0 0
  %2430 = vmatpush1.bf16.msra.mxu0 %v2406
  %2431 = vmatprep.subr.bf16.mxu0 0
  %2432 = vmatpush1.bf16.msra.mxu0 0
  %2433 = vmatprep.subr.bf16.mxu0 0
  %2434 = vmatpush1.bf16.msra.mxu0 0
  %2435 = vmatprep.subr.bf16.mxu0 0
  %2436 = vmatpush1.bf16.msra.mxu0 0
  %2437 = vmatprep.subr.bf16.mxu0 0
  %2438 = vmatpush1.bf16.msra.mxu0 0
  %2439 = vmatprep.subr.bf16.mxu0 0
  %2440 = vmatpush1.bf16.msra.mxu0 0
  %2441 = vmatprep.subr.bf16.mxu0 0
  %2442 = vmatpush1.bf16.msra.mxu0 0
  %2443 = vmatprep.subr.bf16.mxu0 0
  %2444 = vmatpush1.bf16.msra.mxu0 0
  %2445 = vmatprep.subr.bf16.mxu0 0
  %2446 = vmatpush1.bf16.msra.mxu0 0
  %2447 = vmatprep.mubr.bf16.mxu0 0
  %2448 = vmatmul.mubr.bf16.gmra.mrb[0].mxu0 %v2350
  %v2449 = vpop.f32.mrb[0].mxu0
  %v2450 = vadd.f32 0.0, %v2449
  %v2451 = vpop.f32.mrb[0].mxu0
  %v2452 = vpop.f32.mrb[0].mxu0
  %v2453 = vadd.f32 0.0, %v2452
  %v2454 = vpop.f32.mrb[0].mxu0
  %2455 = vdwg.mxu0
  %2456 = vst [vmem:[%s14] sm:$0xff] %v2450
  %2457 = vst [vmem:[%s14 + $0x8] sm:$0xff] %v2453
  // Predicated region
  $region42: #{forward.1} parent=0 // pred_check
    _
  $region43: #{forward.1} parent=0 // pred_check_branch
    %2459 = sbr.rel (0) target = $region45
  $region44: #{forward.1} parent=0 // pred_region
    _
  $region45: #{forward.1} parent=0 // pred_fallthru
    _
  // Predicated region
  $region46: #{forward.1} parent=0 // pred_check
    _
  $region47: #{forward.1} parent=0 // pred_check_branch
    %2461 = sbr.rel (0) target = $region49
  $region48: #{forward.1} parent=0 // pred_region
    _
  $region49: #{forward.1} parent=0 // pred_fallthru
    _
  // Predicated region
  $region50: #{forward.1} parent=0 // pred_check
    _
  $region51: #{forward.1} parent=0 // pred_check_branch
    %2463 = sbr.rel (0) target = $region53
  $region52: #{forward.1} parent=0 // pred_region
    _
  $region53: #{forward.1} parent=0 // pred_fallthru
    _
  // Predicated region
  $region54: #{forward.1} parent=0 // pred_check
    _
  $region55: #{forward.1} parent=0 // pred_check_branch
    %2465 = sbr.rel (0) target = $region57
  $region56: #{forward.1} parent=0 // pred_region
    _
  $region57: #{forward.1} parent=0 // pred_fallthru
    _
  // Predicated region
  $region58: #{forward.1} parent=0 // pred_check
    _
  $region59: #{forward.1} parent=0 // pred_check_branch
    %2467 = sbr.rel (0) target = $region61
  $region60: #{forward.1} parent=0 // pred_region
    _
  $region61: #{forward.1} parent=0 // pred_fallthru
    _
  // Predicated region
  $region62: #{forward.1} parent=0 // pred_check
    _
  $region63: #{forward.1} parent=0 // pred_check_branch
    %2469 = sbr.rel (0) target = $region65
  $region64: #{forward.1} parent=0 // pred_region
    _
  $region65: #{forward.1} parent=0 // pred_fallthru
    _
  // Predicated region
  $region66: #{forward.1} parent=0 // pred_check
    _
  $region67: #{forward.1} parent=0 // pred_check_branch
    %2471 = sbr.rel (0) target = $region69
  $region68: #{forward.1} parent=0 // pred_region
    _
  $region69: #{forward.1} parent=0 // pred_fallthru
    _
  // Predicated region
  $region70: #{forward.1} parent=0 // pred_check
    _
  $region71: #{forward.1} parent=0 // pred_check_branch
    %2473 = sbr.rel (0) target = $region73
  $region72: #{forward.1} parent=0 // pred_region
    _
  $region73: #{forward.1} parent=0 // pred_fallthru
    _
  // Predicated region
  $region74: #{forward.1} parent=0 // pred_check
    _
  $region75: #{forward.1} parent=0 // pred_check_branch
    %2475 = sbr.rel (0) target = $region77
  $region76: #{forward.1} parent=0 // pred_region
    _
  $region77: #{forward.1} parent=0 // pred_fallthru
    _
  // Predicated region
  $region78: #{forward.1} parent=0 // pred_check
    _
  $region79: #{forward.1} parent=0 // pred_check_branch
    %2477 = sbr.rel (0) target = $region81
  $region80: #{forward.1} parent=0 // pred_region
    _
  $region81: #{forward.1} parent=0 // pred_fallthru
    _

</llo_original>
